<compile_context>
chip_gen: v6e
topology: v6e:2x2x1
jax: 0.10.0
libtpu: 0.0.40
codegen_flags: <defaults>
</compile_context>

<pallas_src>
import functools

import jax
import jax.numpy as jnp
from jax.experimental import pallas as pl
from jax.experimental.pallas import tpu as pltpu


def _round_up(x, m):
    return (x + m - 1) // m * m


def _coordconv_kernel(x_ref, w_ref, c_ref, o_ref, *, B, KH, KW, Wp, SEG):
    # x_ref: (Cin, NIN)         zero-padded, flattened, batch-folded input
    # w_ref: (KH*KW, Cout, Cin) per-tap weight matrices (input-channel part)
    # c_ref: (Cout, SEG)        coord-channel contribution + bias (one segment)
    # o_ref: (B, Cout, SEG)     flattened padded-image outputs per batch
    NOUT = B * SEG
    Cout = o_ref.shape[1]
    acc = jnp.zeros((Cout, NOUT), jnp.float32)
    for dy in range(KH):
        for dx in range(KW):
            t = dy * KW + dx          # tap index into w_ref
            s = dy * Wp + dx          # lane shift of this tap
            acc = acc + jnp.dot(w_ref[t], x_ref[:, s:s + NOUT],
                                preferred_element_type=jnp.float32)
    coord = c_ref[...]
    for b in range(B):                # static, tiny unrolled loop
        o_ref[b] = (acc[:, b * SEG:(b + 1) * SEG] + coord).astype(o_ref.dtype)


def coord_conv(x_nchw, weight_oihw, bias):
    """CoordConv forward. x: (B, Cin, H, W); weight: (Cout, Cin+2, KH, KW)."""
    B, Cin, H, W = x_nchw.shape
    Cout, Caug, KH, KW = weight_oihw.shape
    assert Caug == Cin + 2, "CoordConv adds exactly 2 coordinate channels"
    assert KH % 2 == 1 and KW % 2 == 1, "'same' conv assumed (stride=1, pad=(k-1)/2)"

    PH, PW = (KH - 1) // 2, (KW - 1) // 2
    Hp, Wp = H + 2 * PH, W + 2 * PW
    Np = Hp * Wp                           # flattened padded-image length
    shift0 = PH * Wp + PW                  # flat offset of tap (0,0) rel. to output
    SEG = _round_up(Np + 2 * shift0, 128)  # per-batch lane segment (128-aligned)
    NOUT = B * SEG
    NIN = _round_up(NOUT + 2 * shift0, 128)

    f32 = jnp.float32
    x = x_nchw.astype(f32)
    w = weight_oihw.astype(f32)
    b_ = bias.astype(f32)

    # ---- batch-invariant coordinate-channel contribution (+ bias), once ----
    # Matches the torch AddCoords: xx varies along H (/(H-1)), yy along W (/(W-1)),
    # both mapped to [-1, 1].  (H==1 or W==1 divides by zero, same as torch.)
    xx = jnp.broadcast_to((jnp.arange(H, dtype=f32) / (H - 1) * 2.0 - 1.0)[:, None], (H, W))
    yy = jnp.broadcast_to((jnp.arange(W, dtype=f32) / (W - 1) * 2.0 - 1.0)[None, :], (H, W))
    coords = jnp.stack([xx, yy], axis=0)                       # (2, H, W)
    coords_p = jnp.pad(coords, ((0, 0), (PH, PH), (PW, PW)))   # (2, Hp, Wp)
    w_coord = w[:, Cin:, :, :]                                 # (Cout, 2, KH, KW)
    coord_out = jnp.broadcast_to(b_[:, None, None], (Cout, H, W))
    for dy in range(KH):
        for dx in range(KW):
            coord_out = coord_out + jnp.einsum(
                "oc,chw->ohw", w_coord[:, :, dy, dx],
                coords_p[:, dy:dy + H, dx:dx + W],
                precision=jax.lax.Precision.HIGHEST)
    c_seg = jnp.zeros((Cout, Hp, Wp), f32).at[:, PH:PH + H, PW:PW + W].set(coord_out)
    c_seg = jnp.pad(c_seg.reshape(Cout, Np), ((0, 0), (0, SEG - Np)))   # (Cout, SEG)

    # ---- input: zero-pad spatially, flatten, fold batch onto the lane axis ----
    xpad = jnp.pad(x, ((0, 0), (0, 0), (PH, PH), (PW, PW)))    # (B, Cin, Hp, Wp)
    xflat = xpad.reshape(B, Cin, Np)
    xseg = jnp.pad(xflat, ((0, 0), (0, 0), (shift0, SEG - Np - shift0)))  # (B, Cin, SEG)
    xall = jnp.transpose(xseg, (1, 0, 2)).reshape(Cin, NOUT)
    xall = jnp.pad(xall, ((0, 0), (0, NIN - NOUT)))            # (Cin, NIN)

    # ---- per-tap (Cout, Cin) weight matrices for the real input channels ----
    w_taps = jnp.transpose(w[:, :Cin, :, :], (2, 3, 0, 1)).reshape(KH * KW, Cout, Cin)

    kernel = functools.partial(_coordconv_kernel, B=B, KH=KH, KW=KW, Wp=Wp, SEG=SEG)

    out_flat = pl.pallas_call(
        kernel,
        out_shape=jax.ShapeDtypeStruct((B, Cout, SEG), f32),
        grid=(1,),
        in_specs=[
            pl.BlockSpec((Cin, NIN), lambda i: (0, 0)),
            pl.BlockSpec((KH * KW, Cout, Cin), lambda i: (0, 0, 0)),
            pl.BlockSpec((Cout, SEG), lambda i: (0, 0)),
        ],
        out_specs=pl.BlockSpec((B, Cout, SEG), lambda i: (0, 0, 0)),
        compiler_params=pltpu.CompilerParams(
            dimension_semantics=("arbitrary",)),
    )(xall, w_taps, c_seg)

    # Un-flatten: keep the valid padded-image positions, drop the 1-px border.
    # Already (B, Cout, ...) — no NCHW transpose needed.
    out = out_flat[:, :, :Np].reshape(B, Cout, Hp, Wp)[:, :, PH:PH + H, PW:PW + W]
    return out.astype(x_nchw.dtype)


def _reference(x_nchw, weight_oihw, bias):
    """Pure-JAX reference replicating the PyTorch CoordConv forward."""
    B, Cin, H, W = x_nchw.shape
    hh = jnp.arange(H, dtype=jnp.float32) / (H - 1) * 2.0 - 1.0
    ww = jnp.arange(W, dtype=jnp.float32) / (W - 1) * 2.0 - 1.0
    xx = jnp.broadcast_to(hh[None, None, :, None], (B, 1, H, W))
    yy = jnp.broadcast_to(ww[None, None, None, :], (B, 1, H, W))
    aug = jnp.concatenate([x_nchw, xx, yy], axis=1)
    out = jax.lax.conv_general_dilated(
        aug, weight_oihw, window_strides=(1, 1),
        padding=((1, 1), (1, 1)),
        dimension_numbers=("NCHW", "OIHW", "NCHW"),
        precision=jax.lax.Precision.HIGHEST)
    return out + bias[None, :, None, None]


if __name__ == "__main__":
    key = jax.random.PRNGKey(0)
    k1, k2, k3 = jax.random.split(key, 3)

    B, Cin, H, W = 2, 4, 16, 16
    Cout, K = 8, 3

    x = jax.random.normal(k1, (B, Cin, H, W), dtype=jnp.float32)
    # Deterministic synthetic parameters (Conv2d(in=Cin+2, out=Cout, k=3, pad=1)).
    weight = 0.1 * jax.random.normal(k2, (Cout, Cin + 2, K, K), dtype=jnp.float32)
    bias = 0.1 * jax.random.normal(k3, (Cout,), dtype=jnp.float32)

    out = jax.block_until_ready(jax.jit(coord_conv)(x, weight, bias))
    ref = _reference(x, weight, bias)

    assert out.shape == (B, Cout, H, W)
    assert jnp.allclose(out, ref, atol=1e-4, rtol=1e-4), "mismatch vs reference"
    print("KERNEL_OK")
</pallas_src>

<mosaic_0001>
module attributes {stable_mosaic.version = 11 : i64} {
  func.func @_coordconv_kernel(%arg0: i32, %arg1: memref<4x896xf32, #tpu.memory_space<vmem>>, %arg2: memref<9x8x4xf32, #tpu.memory_space<vmem>>, %arg3: memref<8x384xf32, #tpu.memory_space<vmem>>, %arg4: memref<2x8x384xf32, #tpu.memory_space<vmem>>) attributes {dimension_semantics = [#tpu.dimension_semantics<arbitrary>], iteration_bounds = array<i64: 1>, scalar_prefetch = 0 : i64, scratch_operands = 0 : i64, tpu.core_type = #tpu.core_type<tc>, window_params = [{pipeline_mode = #tpu.pipeline_mode<synchronous>, transform_indices = @transform_0, window_bounds = array<i64: 4, 896>}, {pipeline_mode = #tpu.pipeline_mode<synchronous>, transform_indices = @transform_1, window_bounds = array<i64: 9, 8, 4>}, {pipeline_mode = #tpu.pipeline_mode<synchronous>, transform_indices = @transform_2, window_bounds = array<i64: 8, 384>}, {pipeline_mode = #tpu.pipeline_mode<synchronous>, transform_indices = @transform_3, window_bounds = array<i64: 2, 8, 384>}]} {
    %cst = arith.constant 0.000000e+00 : f32
    %0 = vector.broadcast %cst : f32 to vector<8x768xf32>
    %c0 = arith.constant 0 : index
    %c0_0 = arith.constant 0 : index
    %c0_1 = arith.constant 0 : index
    %1 = vector.load %arg2[%c0, %c0_0, %c0_1] : memref<9x8x4xf32, #tpu.memory_space<vmem>>, vector<1x8x4xf32>
    %2 = vector.shape_cast %1 : vector<1x8x4xf32> to vector<8x4xf32>
    %c0_2 = arith.constant 0 : index
    %c0_3 = arith.constant 0 : index
    %3 = vector.load %arg1[%c0_2, %c0_3] : memref<4x896xf32, #tpu.memory_space<vmem>>, vector<4x768xf32>
    %cst_4 = arith.constant dense<0.000000e+00> : vector<8x768xf32>
    %4 = tpu.matmul %2, %3, %cst_4 {dimension_numbers = #tpu.dot_dimension_numbers<[1], [0], [0], [1], [0, 0, 1, 1], [], []>} : vector<8x4xf32>, vector<4x768xf32>, vector<8x768xf32> -> vector<8x768xf32>
    %5 = arith.addf %0, %4 : vector<8x768xf32>
    %c1 = arith.constant 1 : index
    %c0_5 = arith.constant 0 : index
    %c0_6 = arith.constant 0 : index
    %6 = vector.load %arg2[%c1, %c0_5, %c0_6] : memref<9x8x4xf32, #tpu.memory_space<vmem>>, vector<1x8x4xf32>
    %7 = vector.shape_cast %6 : vector<1x8x4xf32> to vector<8x4xf32>
    %c0_7 = arith.constant 0 : index
    %c1_8 = arith.constant 1 : index
    %8 = vector.load %arg1[%c0_7, %c1_8] : memref<4x896xf32, #tpu.memory_space<vmem>>, vector<4x768xf32>
    %cst_9 = arith.constant dense<0.000000e+00> : vector<8x768xf32>
    %9 = tpu.matmul %7, %8, %cst_9 {dimension_numbers = #tpu.dot_dimension_numbers<[1], [0], [0], [1], [0, 0, 1, 1], [], []>} : vector<8x4xf32>, vector<4x768xf32>, vector<8x768xf32> -> vector<8x768xf32>
    %10 = arith.addf %5, %9 : vector<8x768xf32>
    %c2 = arith.constant 2 : index
    %c0_10 = arith.constant 0 : index
    %c0_11 = arith.constant 0 : index
    %11 = vector.load %arg2[%c2, %c0_10, %c0_11] : memref<9x8x4xf32, #tpu.memory_space<vmem>>, vector<1x8x4xf32>
    %12 = vector.shape_cast %11 : vector<1x8x4xf32> to vector<8x4xf32>
    %c0_12 = arith.constant 0 : index
    %c2_13 = arith.constant 2 : index
    %13 = vector.load %arg1[%c0_12, %c2_13] : memref<4x896xf32, #tpu.memory_space<vmem>>, vector<4x768xf32>
    %cst_14 = arith.constant dense<0.000000e+00> : vector<8x768xf32>
    %14 = tpu.matmul %12, %13, %cst_14 {dimension_numbers = #tpu.dot_dimension_numbers<[1], [0], [0], [1], [0, 0, 1, 1], [], []>} : vector<8x4xf32>, vector<4x768xf32>, vector<8x768xf32> -> vector<8x768xf32>
    %15 = arith.addf %10, %14 : vector<8x768xf32>
    %c3 = arith.constant 3 : index
    %c0_15 = arith.constant 0 : index
    %c0_16 = arith.constant 0 : index
    %16 = vector.load %arg2[%c3, %c0_15, %c0_16] : memref<9x8x4xf32, #tpu.memory_space<vmem>>, vector<1x8x4xf32>
    %17 = vector.shape_cast %16 : vector<1x8x4xf32> to vector<8x4xf32>
    %c0_17 = arith.constant 0 : index
    %c18 = arith.constant 18 : index
    %18 = vector.load %arg1[%c0_17, %c18] : memref<4x896xf32, #tpu.memory_space<vmem>>, vector<4x768xf32>
    %cst_18 = arith.constant dense<0.000000e+00> : vector<8x768xf32>
    %19 = tpu.matmul %17, %18, %cst_18 {dimension_numbers = #tpu.dot_dimension_numbers<[1], [0], [0], [1], [0, 0, 1, 1], [], []>} : vector<8x4xf32>, vector<4x768xf32>, vector<8x768xf32> -> vector<8x768xf32>
    %20 = arith.addf %15, %19 : vector<8x768xf32>
    %c4 = arith.constant 4 : index
    %c0_19 = arith.constant 0 : index
    %c0_20 = arith.constant 0 : index
    %21 = vector.load %arg2[%c4, %c0_19, %c0_20] : memref<9x8x4xf32, #tpu.memory_space<vmem>>, vector<1x8x4xf32>
    %22 = vector.shape_cast %21 : vector<1x8x4xf32> to vector<8x4xf32>
    %c0_21 = arith.constant 0 : index
    %c19 = arith.constant 19 : index
    %23 = vector.load %arg1[%c0_21, %c19] : memref<4x896xf32, #tpu.memory_space<vmem>>, vector<4x768xf32>
    %cst_22 = arith.constant dense<0.000000e+00> : vector<8x768xf32>
    %24 = tpu.matmul %22, %23, %cst_22 {dimension_numbers = #tpu.dot_dimension_numbers<[1], [0], [0], [1], [0, 0, 1, 1], [], []>} : vector<8x4xf32>, vector<4x768xf32>, vector<8x768xf32> -> vector<8x768xf32>
    %25 = arith.addf %20, %24 : vector<8x768xf32>
    %c5 = arith.constant 5 : index
    %c0_23 = arith.constant 0 : index
    %c0_24 = arith.constant 0 : index
    %26 = vector.load %arg2[%c5, %c0_23, %c0_24] : memref<9x8x4xf32, #tpu.memory_space<vmem>>, vector<1x8x4xf32>
    %27 = vector.shape_cast %26 : vector<1x8x4xf32> to vector<8x4xf32>
    %c0_25 = arith.constant 0 : index
    %c20 = arith.constant 20 : index
    %28 = vector.load %arg1[%c0_25, %c20] : memref<4x896xf32, #tpu.memory_space<vmem>>, vector<4x768xf32>
    %cst_26 = arith.constant dense<0.000000e+00> : vector<8x768xf32>
    %29 = tpu.matmul %27, %28, %cst_26 {dimension_numbers = #tpu.dot_dimension_numbers<[1], [0], [0], [1], [0, 0, 1, 1], [], []>} : vector<8x4xf32>, vector<4x768xf32>, vector<8x768xf32> -> vector<8x768xf32>
    %30 = arith.addf %25, %29 : vector<8x768xf32>
    %c6 = arith.constant 6 : index
    %c0_27 = arith.constant 0 : index
    %c0_28 = arith.constant 0 : index
    %31 = vector.load %arg2[%c6, %c0_27, %c0_28] : memref<9x8x4xf32, #tpu.memory_space<vmem>>, vector<1x8x4xf32>
    %32 = vector.shape_cast %31 : vector<1x8x4xf32> to vector<8x4xf32>
    %c0_29 = arith.constant 0 : index
    %c36 = arith.constant 36 : index
    %33 = vector.load %arg1[%c0_29, %c36] : memref<4x896xf32, #tpu.memory_space<vmem>>, vector<4x768xf32>
    %cst_30 = arith.constant dense<0.000000e+00> : vector<8x768xf32>
    %34 = tpu.matmul %32, %33, %cst_30 {dimension_numbers = #tpu.dot_dimension_numbers<[1], [0], [0], [1], [0, 0, 1, 1], [], []>} : vector<8x4xf32>, vector<4x768xf32>, vector<8x768xf32> -> vector<8x768xf32>
    %35 = arith.addf %30, %34 : vector<8x768xf32>
    %c7 = arith.constant 7 : index
    %c0_31 = arith.constant 0 : index
    %c0_32 = arith.constant 0 : index
    %36 = vector.load %arg2[%c7, %c0_31, %c0_32] : memref<9x8x4xf32, #tpu.memory_space<vmem>>, vector<1x8x4xf32>
    %37 = vector.shape_cast %36 : vector<1x8x4xf32> to vector<8x4xf32>
    %c0_33 = arith.constant 0 : index
    %c37 = arith.constant 37 : index
    %38 = vector.load %arg1[%c0_33, %c37] : memref<4x896xf32, #tpu.memory_space<vmem>>, vector<4x768xf32>
    %cst_34 = arith.constant dense<0.000000e+00> : vector<8x768xf32>
    %39 = tpu.matmul %37, %38, %cst_34 {dimension_numbers = #tpu.dot_dimension_numbers<[1], [0], [0], [1], [0, 0, 1, 1], [], []>} : vector<8x4xf32>, vector<4x768xf32>, vector<8x768xf32> -> vector<8x768xf32>
    %40 = arith.addf %35, %39 : vector<8x768xf32>
    %c8 = arith.constant 8 : index
    %c0_35 = arith.constant 0 : index
    %c0_36 = arith.constant 0 : index
    %41 = vector.load %arg2[%c8, %c0_35, %c0_36] : memref<9x8x4xf32, #tpu.memory_space<vmem>>, vector<1x8x4xf32>
    %42 = vector.shape_cast %41 : vector<1x8x4xf32> to vector<8x4xf32>
    %c0_37 = arith.constant 0 : index
    %c38 = arith.constant 38 : index
    %43 = vector.load %arg1[%c0_37, %c38] : memref<4x896xf32, #tpu.memory_space<vmem>>, vector<4x768xf32>
    %cst_38 = arith.constant dense<0.000000e+00> : vector<8x768xf32>
    %44 = tpu.matmul %42, %43, %cst_38 {dimension_numbers = #tpu.dot_dimension_numbers<[1], [0], [0], [1], [0, 0, 1, 1], [], []>} : vector<8x4xf32>, vector<4x768xf32>, vector<8x768xf32> -> vector<8x768xf32>
    %45 = arith.addf %40, %44 : vector<8x768xf32>
    %c0_39 = arith.constant 0 : index
    %c0_40 = arith.constant 0 : index
    %46 = vector.load %arg3[%c0_39, %c0_40] : memref<8x384xf32, #tpu.memory_space<vmem>>, vector<8x384xf32>
    %47 = vector.extract_strided_slice %45 {offsets = [0, 0], sizes = [8, 384], strides = [1, 1]} : vector<8x768xf32> to vector<8x384xf32>
    %48 = arith.addf %47, %46 : vector<8x384xf32>
    %c0_41 = arith.constant 0 : index
    %c0_42 = arith.constant 0 : index
    %c0_43 = arith.constant 0 : index
    %49 = vector.load %arg4[%c0_41, %c0_42, %c0_43] : memref<2x8x384xf32, #tpu.memory_space<vmem>>, vector<1x8x384xf32>
    %50 = vector.shape_cast %49 : vector<1x8x384xf32> to vector<8x384xf32>
    %51 = vector.shape_cast %48 : vector<8x384xf32> to vector<1x8x384xf32>
    tpu.vector_store %arg4[%c0_41, %c0_42, %c0_43], %51 {strides = array<i32>} : memref<2x8x384xf32, #tpu.memory_space<vmem>>, vector<1x8x384xf32>,
    %52 = vector.extract_strided_slice %45 {offsets = [0, 384], sizes = [8, 384], strides = [1, 1]} : vector<8x768xf32> to vector<8x384xf32>
    %53 = arith.addf %52, %46 : vector<8x384xf32>
    %c1_44 = arith.constant 1 : index
    %c0_45 = arith.constant 0 : index
    %c0_46 = arith.constant 0 : index
    %54 = vector.load %arg4[%c1_44, %c0_45, %c0_46] : memref<2x8x384xf32, #tpu.memory_space<vmem>>, vector<1x8x384xf32>
    %55 = vector.shape_cast %54 : vector<1x8x384xf32> to vector<8x384xf32>
    %56 = vector.shape_cast %53 : vector<8x384xf32> to vector<1x8x384xf32>
    tpu.vector_store %arg4[%c1_44, %c0_45, %c0_46], %56 {strides = array<i32>} : memref<2x8x384xf32, #tpu.memory_space<vmem>>, vector<1x8x384xf32>,
    return
  }
  func.func @transform_0(%arg0: i32) -> (i32, i32) {
    %c0_i32 = arith.constant 0 : i32
    %c0_i32_0 = arith.constant 0 : i32
    %c0_i32_1 = arith.constant 0 : i32
    return %c0_i32, %c0_i32_0 : i32, i32
  }
  func.func @transform_1(%arg0: i32) -> (i32, i32, i32) {
    %c0_i32 = arith.constant 0 : i32
    %c0_i32_0 = arith.constant 0 : i32
    %c0_i32_1 = arith.constant 0 : i32
    %c0_i32_2 = arith.constant 0 : i32
    return %c0_i32, %c0_i32_0, %c0_i32_1 : i32, i32, i32
  }
  func.func @transform_2(%arg0: i32) -> (i32, i32) {
    %c0_i32 = arith.constant 0 : i32
    %c0_i32_0 = arith.constant 0 : i32
    %c0_i32_1 = arith.constant 0 : i32
    return %c0_i32, %c0_i32_0 : i32, i32
  }
  func.func @transform_3(%arg0: i32) -> (i32, i32, i32) {
    %c0_i32 = arith.constant 0 : i32
    %c0_i32_0 = arith.constant 0 : i32
    %c0_i32_1 = arith.constant 0 : i32
    %c0_i32_2 = arith.constant 0 : i32
    return %c0_i32, %c0_i32_0, %c0_i32_1 : i32, i32, i32
  }
}

</mosaic_0001>

<llo_original>
// kernel: coord_conv.1
$region0: #{coord_conv.1}
  #allocation0 [shape = 'u32[]', space=smem, size = 0x4, offset = 0x4, fixed_abs, tag = 'smem constant byte address 0x4 - core index']
  #allocation1 [shape = 'u32[144,128]{1,0:T(1,128)}', space=vmem, size = 0x12000, scoped, tag = 'internal scratch']
  %s0 = inlined_call_operand.vmem [shape: f32[4,896], index: 0, kind: input, shape index: {}]
  %s1 = inlined_call_operand.vmem [shape: f32[9,8,4], index: 1, kind: input, shape index: {}]
  %s2 = inlined_call_operand.vmem [shape: f32[8,384], index: 2, kind: input, shape index: {}]
  %s3 = inlined_call_operand.vmem [shape: f32[2,8,384], index: 3, kind: output, shape index: {}]
  %s4 = sld [smem:[#allocation0]]
  $region22: #{coord_conv.1} parent=0
    _
  %s6 = ssub.s32 1, %s4
  %s7 = scalar_select 0, %s6, %s4
  // Predicated region
  $region2: #{coord_conv.1} parent=0 // pred_check
    _
  $region3: #{coord_conv.1} parent=0 // pred_check_branch
    %9 = sbr.rel (0) target = $region5
  $region4: #{coord_conv.1} parent=0 // pred_region
    _
  $region5: #{coord_conv.1} parent=0 // pred_fallthru
    _
  // Predicated region
  $region6: #{coord_conv.1} parent=0 // pred_check
    _
  $region7: #{coord_conv.1} parent=0 // pred_check_branch
    %11 = sbr.rel (0) target = $region9
  $region8: #{coord_conv.1} parent=0 // pred_region
    _
  $region9: #{coord_conv.1} parent=0 // pred_fallthru
    _
  // Predicated region
  $region10: #{coord_conv.1} parent=0 // pred_check
    _
  $region11: #{coord_conv.1} parent=0 // pred_check_branch
    %13 = sbr.rel (0) target = $region13
  $region12: #{coord_conv.1} parent=0 // pred_region
    _
  $region13: #{coord_conv.1} parent=0 // pred_fallthru
    _
  %v14 = vld [vmem:[%s1] sm:$0xff]
  %v15 = vld [vmem:[%s0] sm:$0xff]
  %v16 = vld [vmem:[%s0 + $0x8] sm:$0xff]
  %v17 = vld [vmem:[%s0 + $0x10] sm:$0xff]
  %s18 = scalar_lea.vmem %s1, 8
  %v19 = vld [vmem:[%s18] sm:$0xff]
  %v20 = vld [vmem:[%s0] sm:$0xff]
  %v21 = vld [vmem:[%s0 + $0x8] sm:$0xff]
  %v22 = vld [vmem:[%s0 + $0x10] sm:$0xff]
  %v23 = vld [vmem:[%s0 + $0x18] sm:$0xf]
  %v28 = vcombine.high %v20, %v20
  %v29 = vcombine.high %v21, %v21
  %v30 = vcombine.high %v22, %v22
  %31 = vrot.lane.b32.xlu0 %v20, 127
  %v32 = vpop.permute.xlu0 %31
  %33 = vrot.lane.b32.xlu0 %v28, 127
  %v34 = vpop.permute.xlu0 %33
  %35 = vrot.lane.b32.xlu0 %v21, 127
  %v36 = vpop.permute.xlu0 %35
  %37 = vrot.lane.b32.xlu0 %v29, 127
  %v38 = vpop.permute.xlu0 %37
  %39 = vrot.lane.b32.xlu0 %v22, 127
  %v40 = vpop.permute.xlu0 %39
  %41 = vrot.lane.b32.xlu0 %v30, 127
  %v42 = vpop.permute.xlu0 %41
  %43 = vrot.lane.b32.xlu0 %v23, 127
  %v44 = vpop.permute.xlu0 %43
  %vm45 = vcmask 1039360
  %v46 = vsel %vm45, %v32, %v34
  %v47 = vsel %vm45, %v34, %v36
  %v48 = vsel %vm45, %v36, %v38
  %v49 = vsel %vm45, %v38, %v40
  %v50 = vsel %vm45, %v40, %v42
  %v51 = vsel %vm45, %v42, %v44
  %vm52 = vcmask 31744
  %v54 = vsel %vm52, %v19, 0
  %vm56 = vcmask 1043456
  %v57 = vsel %vm56, %v46, 0
  %v59 = vsel %vm56, %v47, 0
  %v61 = vsel %vm56, %v48, 0
  %v63 = vsel %vm56, %v49, 0
  %v65 = vsel %vm56, %v50, 0
  %v67 = vsel %vm56, %v51, 0
  %69 = vmatprep.subr.mxu0 0.0
  %70 = vmatpush1.msra.mxu0 0.0
  %71 = vmatprep.subr.mxu0 0.0
  %72 = vmatpush1.msra.mxu0 0.0
  %73 = vmatprep.subr.mxu0 0.0
  %74 = vmatpush1.msra.mxu0 0.0
  %75 = vmatprep.subr.mxu0 0.0
  %76 = vmatpush1.msra.mxu0 0.0
  %77 = vmatprep.subr.mxu0 0.0
  %78 = vmatpush1.msra.mxu0 0.0
  %79 = vmatprep.subr.mxu0 0.0
  %80 = vmatpush1.msra.mxu0 0.0
  %81 = vmatprep.subr.mxu0 0.0
  %82 = vmatpush1.msra.mxu0 0.0
  %83 = vmatprep.subr.mxu0 0.0
  %84 = vmatpush1.msra.mxu0 0.0
  %85 = vmatprep.subr.mxu0 0.0
  %86 = vmatpush1.msra.mxu0 0.0
  %87 = vmatprep.subr.mxu0 0.0
  %88 = vmatpush1.msra.mxu0 0.0
  %89 = vmatprep.subr.mxu0 0.0
  %90 = vmatpush1.msra.mxu0 0.0
  %91 = vmatprep.subr.mxu0 0.0
  %92 = vmatpush1.msra.mxu0 0.0
  %93 = vmatprep.subr.mxu0 0.0
  %94 = vmatpush1.msra.mxu0 0.0
  %95 = vmatprep.subr.mxu0 0.0
  %96 = vmatpush1.msra.mxu0 0.0
  %97 = vmatprep.subr.mxu0 0.0
  %98 = vmatpush1.msra.mxu0 0.0
  %99 = vmatprep.subr.mxu0 %v59
  %100 = vmatpush1.msra.mxu0 %v57
  %101 = vmatprep.subr.mxu0 0.0
  %102 = vmatpush2.msra.mxu0 0.0
  %103 = vmatprep.subr.mxu0 0.0
  %104 = vmatpush2.msra.mxu0 0.0
  %105 = vmatprep.subr.mxu0 0.0
  %106 = vmatpush2.msra.mxu0 0.0
  %107 = vmatprep.subr.mxu0 0.0
  %108 = vmatpush2.msra.mxu0 0.0
  %109 = vmatprep.subr.mxu0 0.0
  %110 = vmatpush2.msra.mxu0 0.0
  %111 = vmatprep.subr.mxu0 0.0
  %112 = vmatpush2.msra.mxu0 0.0
  %113 = vmatprep.subr.mxu0 0.0
  %114 = vmatpush2.msra.mxu0 0.0
  %115 = vmatprep.subr.mxu0 0.0
  %116 = vmatpush2.msra.mxu0 0.0
  %117 = vmatprep.subr.mxu0 0.0
  %118 = vmatpush2.msra.mxu0 0.0
  %119 = vmatprep.subr.mxu0 0.0
  %120 = vmatpush2.msra.mxu0 0.0
  %121 = vmatprep.subr.mxu0 0.0
  %122 = vmatpush2.msra.mxu0 0.0
  %123 = vmatprep.subr.mxu0 0.0
  %124 = vmatpush2.msra.mxu0 0.0
  %125 = vmatprep.subr.mxu0 0.0
  %126 = vmatpush2.msra.mxu0 0.0
  %127 = vmatprep.subr.mxu0 0.0
  %128 = vmatpush2.msra.mxu0 0.0
  %129 = vmatprep.subr.mxu0 0.0
  %130 = vmatpush2.msra.mxu0 0.0
  %131 = vmatprep.subr.mxu0 0.0
  %132 = vmatpush2.msra.mxu0 0.0
  %133 = vmatprep.mubr.f32.mxu0 0.0
  %134 = vmatmul.mubr.f32.gmra.mxu0 %v54
  %v135 = vpop.f32.mrf.mxu0
  %v136 = vadd.f32 0.0, %v135
  %v137 = vpop.f32.mrf.mxu0
  %v138 = vadd.f32 0.0, %v137
  %139 = vdwg.mxu0
  %140 = vmatprep.subr.mxu0 0.0
  %141 = vmatpush1.msra.mxu0 0.0
  %142 = vmatprep.subr.mxu0 0.0
  %143 = vmatpush1.msra.mxu0 0.0
  %144 = vmatprep.subr.mxu0 0.0
  %145 = vmatpush1.msra.mxu0 0.0
  %146 = vmatprep.subr.mxu0 0.0
  %147 = vmatpush1.msra.mxu0 0.0
  %148 = vmatprep.subr.mxu0 0.0
  %149 = vmatpush1.msra.mxu0 0.0
  %150 = vmatprep.subr.mxu0 0.0
  %151 = vmatpush1.msra.mxu0 0.0
  %152 = vmatprep.subr.mxu0 0.0
  %153 = vmatpush1.msra.mxu0 0.0
  %154 = vmatprep.subr.mxu0 0.0
  %155 = vmatpush1.msra.mxu0 0.0
  %156 = vmatprep.subr.mxu0 0.0
  %157 = vmatpush1.msra.mxu0 0.0
  %158 = vmatprep.subr.mxu0 0.0
  %159 = vmatpush1.msra.mxu0 0.0
  %160 = vmatprep.subr.mxu0 0.0
  %161 = vmatpush1.msra.mxu0 0.0
  %162 = vmatprep.subr.mxu0 0.0
  %163 = vmatpush1.msra.mxu0 0.0
  %164 = vmatprep.subr.mxu0 0.0
  %165 = vmatpush1.msra.mxu0 0.0
  %166 = vmatprep.subr.mxu0 0.0
  %167 = vmatpush1.msra.mxu0 0.0
  %168 = vmatprep.subr.mxu0 0.0
  %169 = vmatpush1.msra.mxu0 0.0
  %170 = vmatprep.subr.mxu0 %v63
  %171 = vmatpush1.msra.mxu0 %v61
  %172 = vmatprep.subr.mxu0 0.0
  %173 = vmatpush2.msra.mxu0 0.0
  %174 = vmatprep.subr.mxu0 0.0
  %175 = vmatpush2.msra.mxu0 0.0
  %176 = vmatprep.subr.mxu0 0.0
  %177 = vmatpush2.msra.mxu0 0.0
  %178 = vmatprep.subr.mxu0 0.0
  %179 = vmatpush2.msra.mxu0 0.0
  %180 = vmatprep.subr.mxu0 0.0
  %181 = vmatpush2.msra.mxu0 0.0
  %182 = vmatprep.subr.mxu0 0.0
  %183 = vmatpush2.msra.mxu0 0.0
  %184 = vmatprep.subr.mxu0 0.0
  %185 = vmatpush2.msra.mxu0 0.0
  %186 = vmatprep.subr.mxu0 0.0
  %187 = vmatpush2.msra.mxu0 0.0
  %188 = vmatprep.subr.mxu0 0.0
  %189 = vmatpush2.msra.mxu0 0.0
  %190 = vmatprep.subr.mxu0 0.0
  %191 = vmatpush2.msra.mxu0 0.0
  %192 = vmatprep.subr.mxu0 0.0
  %193 = vmatpush2.msra.mxu0 0.0
  %194 = vmatprep.subr.mxu0 0.0
  %195 = vmatpush2.msra.mxu0 0.0
  %196 = vmatprep.subr.mxu0 0.0
  %197 = vmatpush2.msra.mxu0 0.0
  %198 = vmatprep.subr.mxu0 0.0
  %199 = vmatpush2.msra.mxu0 0.0
  %200 = vmatprep.subr.mxu0 0.0
  %201 = vmatpush2.msra.mxu0 0.0
  %202 = vmatprep.subr.mxu0 0.0
  %203 = vmatpush2.msra.mxu0 0.0
  %204 = vmatprep.mubr.f32.mxu0 0.0
  %205 = vmatmul.mubr.f32.gmra.mxu0 %v54
  %v206 = vpop.f32.mrf.mxu0
  %v207 = vadd.f32 0.0, %v206
  %v208 = vpop.f32.mrf.mxu0
  %v209 = vadd.f32 0.0, %v208
  %210 = vdwg.mxu0
  %211 = vmatprep.subr.mxu0 0.0
  %212 = vmatpush1.msra.mxu0 0.0
  %213 = vmatprep.subr.mxu0 0.0
  %214 = vmatpush1.msra.mxu0 0.0
  %215 = vmatprep.subr.mxu0 0.0
  %216 = vmatpush1.msra.mxu0 0.0
  %217 = vmatprep.subr.mxu0 0.0
  %218 = vmatpush1.msra.mxu0 0.0
  %219 = vmatprep.subr.mxu0 0.0
  %220 = vmatpush1.msra.mxu0 0.0
  %221 = vmatprep.subr.mxu0 0.0
  %222 = vmatpush1.msra.mxu0 0.0
  %223 = vmatprep.subr.mxu0 0.0
  %224 = vmatpush1.msra.mxu0 0.0
  %225 = vmatprep.subr.mxu0 0.0
  %226 = vmatpush1.msra.mxu0 0.0
  %227 = vmatprep.subr.mxu0 0.0
  %228 = vmatpush1.msra.mxu0 0.0
  %229 = vmatprep.subr.mxu0 0.0
  %230 = vmatpush1.msra.mxu0 0.0
  %231 = vmatprep.subr.mxu0 0.0
  %232 = vmatpush1.msra.mxu0 0.0
  %233 = vmatprep.subr.mxu0 0.0
  %234 = vmatpush1.msra.mxu0 0.0
  %235 = vmatprep.subr.mxu0 0.0
  %236 = vmatpush1.msra.mxu0 0.0
  %237 = vmatprep.subr.mxu0 0.0
  %238 = vmatpush1.msra.mxu0 0.0
  %239 = vmatprep.subr.mxu0 0.0
  %240 = vmatpush1.msra.mxu0 0.0
  %241 = vmatprep.subr.mxu0 %v67
  %242 = vmatpush1.msra.mxu0 %v65
  %243 = vmatprep.subr.mxu0 0.0
  %244 = vmatpush2.msra.mxu0 0.0
  %245 = vmatprep.subr.mxu0 0.0
  %246 = vmatpush2.msra.mxu0 0.0
  %247 = vmatprep.subr.mxu0 0.0
  %248 = vmatpush2.msra.mxu0 0.0
  %249 = vmatprep.subr.mxu0 0.0
  %250 = vmatpush2.msra.mxu0 0.0
  %251 = vmatprep.subr.mxu0 0.0
  %252 = vmatpush2.msra.mxu0 0.0
  %253 = vmatprep.subr.mxu0 0.0
  %254 = vmatpush2.msra.mxu0 0.0
  %255 = vmatprep.subr.mxu0 0.0
  %256 = vmatpush2.msra.mxu0 0.0
  %257 = vmatprep.subr.mxu0 0.0
  %258 = vmatpush2.msra.mxu0 0.0
  %259 = vmatprep.subr.mxu0 0.0
  %260 = vmatpush2.msra.mxu0 0.0
  %261 = vmatprep.subr.mxu0 0.0
  %262 = vmatpush2.msra.mxu0 0.0
  %263 = vmatprep.subr.mxu0 0.0
  %264 = vmatpush2.msra.mxu0 0.0
  %265 = vmatprep.subr.mxu0 0.0
  %266 = vmatpush2.msra.mxu0 0.0
  %267 = vmatprep.subr.mxu0 0.0
  %268 = vmatpush2.msra.mxu0 0.0
  %269 = vmatprep.subr.mxu0 0.0
  %270 = vmatpush2.msra.mxu0 0.0
  %271 = vmatprep.subr.mxu0 0.0
  %272 = vmatpush2.msra.mxu0 0.0
  %273 = vmatprep.subr.mxu0 0.0
  %274 = vmatpush2.msra.mxu0 0.0
  %275 = vmatprep.mubr.f32.mxu0 0.0
  %276 = vmatmul.mubr.f32.gmra.mxu0 %v54
  %v277 = vpop.f32.mrf.mxu0
  %v278 = vadd.f32 0.0, %v277
  %v279 = vpop.f32.mrf.mxu0
  %v280 = vadd.f32 0.0, %v279
  %281 = vdwg.mxu0
  %v285 = vcombine.high %v15, %v15
  %v286 = vcombine.high %v16, %v16
  %v287 = vcombine.high %v17, %v17
  %v289 = vsel %vm52, %v14, 0
  %v291 = vsel %vm56, %v15, 0
  %v293 = vsel %vm56, %v285, 0
  %v295 = vsel %vm56, %v16, 0
  %v297 = vsel %vm56, %v286, 0
  %v299 = vsel %vm56, %v17, 0
  %v301 = vsel %vm56, %v287, 0
  %303 = vmatprep.subr.mxu0 0.0
  %304 = vmatpush1.msra.mxu0 0.0
  %305 = vmatprep.subr.mxu0 0.0
  %306 = vmatpush1.msra.mxu0 0.0
  %307 = vmatprep.subr.mxu0 0.0
  %308 = vmatpush1.msra.mxu0 0.0
  %309 = vmatprep.subr.mxu0 0.0
  %310 = vmatpush1.msra.mxu0 0.0
  %311 = vmatprep.subr.mxu0 0.0
  %312 = vmatpush1.msra.mxu0 0.0
  %313 = vmatprep.subr.mxu0 0.0
  %314 = vmatpush1.msra.mxu0 0.0
  %315 = vmatprep.subr.mxu0 0.0
  %316 = vmatpush1.msra.mxu0 0.0
  %317 = vmatprep.subr.mxu0 0.0
  %318 = vmatpush1.msra.mxu0 0.0
  %319 = vmatprep.subr.mxu0 0.0
  %320 = vmatpush1.msra.mxu0 0.0
  %321 = vmatprep.subr.mxu0 0.0
  %322 = vmatpush1.msra.mxu0 0.0
  %323 = vmatprep.subr.mxu0 0.0
  %324 = vmatpush1.msra.mxu0 0.0
  %325 = vmatprep.subr.mxu0 0.0
  %326 = vmatpush1.msra.mxu0 0.0
  %327 = vmatprep.subr.mxu0 0.0
  %328 = vmatpush1.msra.mxu0 0.0
  %329 = vmatprep.subr.mxu0 0.0
  %330 = vmatpush1.msra.mxu0 0.0
  %331 = vmatprep.subr.mxu0 0.0
  %332 = vmatpush1.msra.mxu0 0.0
  %333 = vmatprep.subr.mxu0 %v293
  %334 = vmatpush1.msra.mxu0 %v291
  %335 = vmatprep.subr.mxu0 0.0
  %336 = vmatpush2.msra.mxu0 0.0
  %337 = vmatprep.subr.mxu0 0.0
  %338 = vmatpush2.msra.mxu0 0.0
  %339 = vmatprep.subr.mxu0 0.0
  %340 = vmatpush2.msra.mxu0 0.0
  %341 = vmatprep.subr.mxu0 0.0
  %342 = vmatpush2.msra.mxu0 0.0
  %343 = vmatprep.subr.mxu0 0.0
  %344 = vmatpush2.msra.mxu0 0.0
  %345 = vmatprep.subr.mxu0 0.0
  %346 = vmatpush2.msra.mxu0 0.0
  %347 = vmatprep.subr.mxu0 0.0
  %348 = vmatpush2.msra.mxu0 0.0
  %349 = vmatprep.subr.mxu0 0.0
  %350 = vmatpush2.msra.mxu0 0.0
  %351 = vmatprep.subr.mxu0 0.0
  %352 = vmatpush2.msra.mxu0 0.0
  %353 = vmatprep.subr.mxu0 0.0
  %354 = vmatpush2.msra.mxu0 0.0
  %355 = vmatprep.subr.mxu0 0.0
  %356 = vmatpush2.msra.mxu0 0.0
  %357 = vmatprep.subr.mxu0 0.0
  %358 = vmatpush2.msra.mxu0 0.0
  %359 = vmatprep.subr.mxu0 0.0
  %360 = vmatpush2.msra.mxu0 0.0
  %361 = vmatprep.subr.mxu0 0.0
  %362 = vmatpush2.msra.mxu0 0.0
  %363 = vmatprep.subr.mxu0 0.0
  %364 = vmatpush2.msra.mxu0 0.0
  %365 = vmatprep.subr.mxu0 0.0
  %366 = vmatpush2.msra.mxu0 0.0
  %367 = vmatprep.mubr.f32.mxu0 0.0
  %368 = vmatmul.mubr.f32.gmra.mxu0 %v289
  %v369 = vpop.f32.mrf.mxu0
  %v370 = vadd.f32 %v136, %v369
  %v371 = vpop.f32.mrf.mxu0
  %v372 = vadd.f32 %v138, %v371
  %373 = vdwg.mxu0
  %374 = vmatprep.subr.mxu0 0.0
  %375 = vmatpush1.msra.mxu0 0.0
  %376 = vmatprep.subr.mxu0 0.0
  %377 = vmatpush1.msra.mxu0 0.0
  %378 = vmatprep.subr.mxu0 0.0
  %379 = vmatpush1.msra.mxu0 0.0
  %380 = vmatprep.subr.mxu0 0.0
  %381 = vmatpush1.msra.mxu0 0.0
  %382 = vmatprep.subr.mxu0 0.0
  %383 = vmatpush1.msra.mxu0 0.0
  %384 = vmatprep.subr.mxu0 0.0
  %385 = vmatpush1.msra.mxu0 0.0
  %386 = vmatprep.subr.mxu0 0.0
  %387 = vmatpush1.msra.mxu0 0.0
  %388 = vmatprep.subr.mxu0 0.0
  %389 = vmatpush1.msra.mxu0 0.0
  %390 = vmatprep.subr.mxu0 0.0
  %391 = vmatpush1.msra.mxu0 0.0
  %392 = vmatprep.subr.mxu0 0.0
  %393 = vmatpush1.msra.mxu0 0.0
  %394 = vmatprep.subr.mxu0 0.0
  %395 = vmatpush1.msra.mxu0 0.0
  %396 = vmatprep.subr.mxu0 0.0
  %397 = vmatpush1.msra.mxu0 0.0
  %398 = vmatprep.subr.mxu0 0.0
  %399 = vmatpush1.msra.mxu0 0.0
  %400 = vmatprep.subr.mxu0 0.0
  %401 = vmatpush1.msra.mxu0 0.0
  %402 = vmatprep.subr.mxu0 0.0
  %403 = vmatpush1.msra.mxu0 0.0
  %404 = vmatprep.subr.mxu0 %v297
  %405 = vmatpush1.msra.mxu0 %v295
  %406 = vmatprep.subr.mxu0 0.0
  %407 = vmatpush2.msra.mxu0 0.0
  %408 = vmatprep.subr.mxu0 0.0
  %409 = vmatpush2.msra.mxu0 0.0
  %410 = vmatprep.subr.mxu0 0.0
  %411 = vmatpush2.msra.mxu0 0.0
  %412 = vmatprep.subr.mxu0 0.0
  %413 = vmatpush2.msra.mxu0 0.0
  %414 = vmatprep.subr.mxu0 0.0
  %415 = vmatpush2.msra.mxu0 0.0
  %416 = vmatprep.subr.mxu0 0.0
  %417 = vmatpush2.msra.mxu0 0.0
  %418 = vmatprep.subr.mxu0 0.0
  %419 = vmatpush2.msra.mxu0 0.0
  %420 = vmatprep.subr.mxu0 0.0
  %421 = vmatpush2.msra.mxu0 0.0
  %422 = vmatprep.subr.mxu0 0.0
  %423 = vmatpush2.msra.mxu0 0.0
  %424 = vmatprep.subr.mxu0 0.0
  %425 = vmatpush2.msra.mxu0 0.0
  %426 = vmatprep.subr.mxu0 0.0
  %427 = vmatpush2.msra.mxu0 0.0
  %428 = vmatprep.subr.mxu0 0.0
  %429 = vmatpush2.msra.mxu0 0.0
  %430 = vmatprep.subr.mxu0 0.0
  %431 = vmatpush2.msra.mxu0 0.0
  %432 = vmatprep.subr.mxu0 0.0
  %433 = vmatpush2.msra.mxu0 0.0
  %434 = vmatprep.subr.mxu0 0.0
  %435 = vmatpush2.msra.mxu0 0.0
  %436 = vmatprep.subr.mxu0 0.0
  %437 = vmatpush2.msra.mxu0 0.0
  %438 = vmatprep.mubr.f32.mxu0 0.0
  %439 = vmatmul.mubr.f32.gmra.mxu0 %v289
  %v440 = vpop.f32.mrf.mxu0
  %v441 = vadd.f32 %v207, %v440
  %v442 = vpop.f32.mrf.mxu0
  %v443 = vadd.f32 %v209, %v442
  %444 = vdwg.mxu0
  %445 = vmatprep.subr.mxu0 0.0
  %446 = vmatpush1.msra.mxu0 0.0
  %447 = vmatprep.subr.mxu0 0.0
  %448 = vmatpush1.msra.mxu0 0.0
  %449 = vmatprep.subr.mxu0 0.0
  %450 = vmatpush1.msra.mxu0 0.0
  %451 = vmatprep.subr.mxu0 0.0
  %452 = vmatpush1.msra.mxu0 0.0
  %453 = vmatprep.subr.mxu0 0.0
  %454 = vmatpush1.msra.mxu0 0.0
  %455 = vmatprep.subr.mxu0 0.0
  %456 = vmatpush1.msra.mxu0 0.0
  %457 = vmatprep.subr.mxu0 0.0
  %458 = vmatpush1.msra.mxu0 0.0
  %459 = vmatprep.subr.mxu0 0.0
  %460 = vmatpush1.msra.mxu0 0.0
  %461 = vmatprep.subr.mxu0 0.0
  %462 = vmatpush1.msra.mxu0 0.0
  %463 = vmatprep.subr.mxu0 0.0
  %464 = vmatpush1.msra.mxu0 0.0
  %465 = vmatprep.subr.mxu0 0.0
  %466 = vmatpush1.msra.mxu0 0.0
  %467 = vmatprep.subr.mxu0 0.0
  %468 = vmatpush1.msra.mxu0 0.0
  %469 = vmatprep.subr.mxu0 0.0
  %470 = vmatpush1.msra.mxu0 0.0
  %471 = vmatprep.subr.mxu0 0.0
  %472 = vmatpush1.msra.mxu0 0.0
  %473 = vmatprep.subr.mxu0 0.0
  %474 = vmatpush1.msra.mxu0 0.0
  %475 = vmatprep.subr.mxu0 %v301
  %476 = vmatpush1.msra.mxu0 %v299
  %477 = vmatprep.subr.mxu0 0.0
  %478 = vmatpush2.msra.mxu0 0.0
  %479 = vmatprep.subr.mxu0 0.0
  %480 = vmatpush2.msra.mxu0 0.0
  %481 = vmatprep.subr.mxu0 0.0
  %482 = vmatpush2.msra.mxu0 0.0
  %483 = vmatprep.subr.mxu0 0.0
  %484 = vmatpush2.msra.mxu0 0.0
  %485 = vmatprep.subr.mxu0 0.0
  %486 = vmatpush2.msra.mxu0 0.0
  %487 = vmatprep.subr.mxu0 0.0
  %488 = vmatpush2.msra.mxu0 0.0
  %489 = vmatprep.subr.mxu0 0.0
  %490 = vmatpush2.msra.mxu0 0.0
  %491 = vmatprep.subr.mxu0 0.0
  %492 = vmatpush2.msra.mxu0 0.0
  %493 = vmatprep.subr.mxu0 0.0
  %494 = vmatpush2.msra.mxu0 0.0
  %495 = vmatprep.subr.mxu0 0.0
  %496 = vmatpush2.msra.mxu0 0.0
  %497 = vmatprep.subr.mxu0 0.0
  %498 = vmatpush2.msra.mxu0 0.0
  %499 = vmatprep.subr.mxu0 0.0
  %500 = vmatpush2.msra.mxu0 0.0
  %501 = vmatprep.subr.mxu0 0.0
  %502 = vmatpush2.msra.mxu0 0.0
  %503 = vmatprep.subr.mxu0 0.0
  %504 = vmatpush2.msra.mxu0 0.0
  %505 = vmatprep.subr.mxu0 0.0
  %506 = vmatpush2.msra.mxu0 0.0
  %507 = vmatprep.subr.mxu0 0.0
  %508 = vmatpush2.msra.mxu0 0.0
  %509 = vmatprep.mubr.f32.mxu0 0.0
  %510 = vmatmul.mubr.f32.gmra.mxu0 %v289
  %v511 = vpop.f32.mrf.mxu0
  %v512 = vadd.f32 %v278, %v511
  %v513 = vpop.f32.mrf.mxu0
  %v514 = vadd.f32 %v280, %v513
  %515 = vdwg.mxu0
  %s516 = scalar_lea.vmem %s1, 16
  %v517 = vld [vmem:[%s516] sm:$0xff]
  %v518 = vld [vmem:[%s0] sm:$0xff]
  %v519 = vld [vmem:[%s0 + $0x8] sm:$0xff]
  %v520 = vld [vmem:[%s0 + $0x10] sm:$0xff]
  %v521 = vld [vmem:[%s0 + $0x18] sm:$0xf]
  %v526 = vcombine.high %v518, %v518
  %v527 = vcombine.high %v519, %v519
  %v528 = vcombine.high %v520, %v520
  %529 = vrot.lane.b32.xlu0 %v518, 126
  %v530 = vpop.permute.xlu0 %529
  %531 = vrot.lane.b32.xlu0 %v526, 126
  %v532 = vpop.permute.xlu0 %531
  %533 = vrot.lane.b32.xlu0 %v519, 126
  %v534 = vpop.permute.xlu0 %533
  %535 = vrot.lane.b32.xlu0 %v527, 126
  %v536 = vpop.permute.xlu0 %535
  %537 = vrot.lane.b32.xlu0 %v520, 126
  %v538 = vpop.permute.xlu0 %537
  %539 = vrot.lane.b32.xlu0 %v528, 126
  %v540 = vpop.permute.xlu0 %539
  %541 = vrot.lane.b32.xlu0 %v521, 126
  %v542 = vpop.permute.xlu0 %541
  %vm543 = vcmask 1031168
  %v544 = vsel %vm543, %v530, %v532
  %v545 = vsel %vm543, %v532, %v534
  %v546 = vsel %vm543, %v534, %v536
  %v547 = vsel %vm543, %v536, %v538
  %v548 = vsel %vm543, %v538, %v540
  %v549 = vsel %vm543, %v540, %v542
  %v551 = vsel %vm52, %v517, 0
  %v553 = vsel %vm56, %v544, 0
  %v555 = vsel %vm56, %v545, 0
  %v557 = vsel %vm56, %v546, 0
  %v559 = vsel %vm56, %v547, 0
  %v561 = vsel %vm56, %v548, 0
  %v563 = vsel %vm56, %v549, 0
  %565 = vmatprep.subr.mxu0 0.0
  %566 = vmatpush1.msra.mxu0 0.0
  %567 = vmatprep.subr.mxu0 0.0
  %568 = vmatpush1.msra.mxu0 0.0
  %569 = vmatprep.subr.mxu0 0.0
  %570 = vmatpush1.msra.mxu0 0.0
  %571 = vmatprep.subr.mxu0 0.0
  %572 = vmatpush1.msra.mxu0 0.0
  %573 = vmatprep.subr.mxu0 0.0
  %574 = vmatpush1.msra.mxu0 0.0
  %575 = vmatprep.subr.mxu0 0.0
  %576 = vmatpush1.msra.mxu0 0.0
  %577 = vmatprep.subr.mxu0 0.0
  %578 = vmatpush1.msra.mxu0 0.0
  %579 = vmatprep.subr.mxu0 0.0
  %580 = vmatpush1.msra.mxu0 0.0
  %581 = vmatprep.subr.mxu0 0.0
  %582 = vmatpush1.msra.mxu0 0.0
  %583 = vmatprep.subr.mxu0 0.0
  %584 = vmatpush1.msra.mxu0 0.0
  %585 = vmatprep.subr.mxu0 0.0
  %586 = vmatpush1.msra.mxu0 0.0
  %587 = vmatprep.subr.mxu0 0.0
  %588 = vmatpush1.msra.mxu0 0.0
  %589 = vmatprep.subr.mxu0 0.0
  %590 = vmatpush1.msra.mxu0 0.0
  %591 = vmatprep.subr.mxu0 0.0
  %592 = vmatpush1.msra.mxu0 0.0
  %593 = vmatprep.subr.mxu0 0.0
  %594 = vmatpush1.msra.mxu0 0.0
  %595 = vmatprep.subr.mxu0 %v555
  %596 = vmatpush1.msra.mxu0 %v553
  %597 = vmatprep.subr.mxu0 0.0
  %598 = vmatpush2.msra.mxu0 0.0
  %599 = vmatprep.subr.mxu0 0.0
  %600 = vmatpush2.msra.mxu0 0.0
  %601 = vmatprep.subr.mxu0 0.0
  %602 = vmatpush2.msra.mxu0 0.0
  %603 = vmatprep.subr.mxu0 0.0
  %604 = vmatpush2.msra.mxu0 0.0
  %605 = vmatprep.subr.mxu0 0.0
  %606 = vmatpush2.msra.mxu0 0.0
  %607 = vmatprep.subr.mxu0 0.0
  %608 = vmatpush2.msra.mxu0 0.0
  %609 = vmatprep.subr.mxu0 0.0
  %610 = vmatpush2.msra.mxu0 0.0
  %611 = vmatprep.subr.mxu0 0.0
  %612 = vmatpush2.msra.mxu0 0.0
  %613 = vmatprep.subr.mxu0 0.0
  %614 = vmatpush2.msra.mxu0 0.0
  %615 = vmatprep.subr.mxu0 0.0
  %616 = vmatpush2.msra.mxu0 0.0
  %617 = vmatprep.subr.mxu0 0.0
  %618 = vmatpush2.msra.mxu0 0.0
  %619 = vmatprep.subr.mxu0 0.0
  %620 = vmatpush2.msra.mxu0 0.0
  %621 = vmatprep.subr.mxu0 0.0
  %622 = vmatpush2.msra.mxu0 0.0
  %623 = vmatprep.subr.mxu0 0.0
  %624 = vmatpush2.msra.mxu0 0.0
  %625 = vmatprep.subr.mxu0 0.0
  %626 = vmatpush2.msra.mxu0 0.0
  %627 = vmatprep.subr.mxu0 0.0
  %628 = vmatpush2.msra.mxu0 0.0
  %629 = vmatprep.mubr.f32.mxu0 0.0
  %630 = vmatmul.mubr.f32.gmra.mxu0 %v551
  %v631 = vpop.f32.mrf.mxu0
  %v632 = vadd.f32 0.0, %v631
  %v633 = vpop.f32.mrf.mxu0
  %v634 = vadd.f32 0.0, %v633
  %635 = vdwg.mxu0
  %636 = vmatprep.subr.mxu0 0.0
  %637 = vmatpush1.msra.mxu0 0.0
  %638 = vmatprep.subr.mxu0 0.0
  %639 = vmatpush1.msra.mxu0 0.0
  %640 = vmatprep.subr.mxu0 0.0
  %641 = vmatpush1.msra.mxu0 0.0
  %642 = vmatprep.subr.mxu0 0.0
  %643 = vmatpush1.msra.mxu0 0.0
  %644 = vmatprep.subr.mxu0 0.0
  %645 = vmatpush1.msra.mxu0 0.0
  %646 = vmatprep.subr.mxu0 0.0
  %647 = vmatpush1.msra.mxu0 0.0
  %648 = vmatprep.subr.mxu0 0.0
  %649 = vmatpush1.msra.mxu0 0.0
  %650 = vmatprep.subr.mxu0 0.0
  %651 = vmatpush1.msra.mxu0 0.0
  %652 = vmatprep.subr.mxu0 0.0
  %653 = vmatpush1.msra.mxu0 0.0
  %654 = vmatprep.subr.mxu0 0.0
  %655 = vmatpush1.msra.mxu0 0.0
  %656 = vmatprep.subr.mxu0 0.0
  %657 = vmatpush1.msra.mxu0 0.0
  %658 = vmatprep.subr.mxu0 0.0
  %659 = vmatpush1.msra.mxu0 0.0
  %660 = vmatprep.subr.mxu0 0.0
  %661 = vmatpush1.msra.mxu0 0.0
  %662 = vmatprep.subr.mxu0 0.0
  %663 = vmatpush1.msra.mxu0 0.0
  %664 = vmatprep.subr.mxu0 0.0
  %665 = vmatpush1.msra.mxu0 0.0
  %666 = vmatprep.subr.mxu0 %v559
  %667 = vmatpush1.msra.mxu0 %v557
  %668 = vmatprep.subr.mxu0 0.0
  %669 = vmatpush2.msra.mxu0 0.0
  %670 = vmatprep.subr.mxu0 0.0
  %671 = vmatpush2.msra.mxu0 0.0
  %672 = vmatprep.subr.mxu0 0.0
  %673 = vmatpush2.msra.mxu0 0.0
  %674 = vmatprep.subr.mxu0 0.0
  %675 = vmatpush2.msra.mxu0 0.0
  %676 = vmatprep.subr.mxu0 0.0
  %677 = vmatpush2.msra.mxu0 0.0
  %678 = vmatprep.subr.mxu0 0.0
  %679 = vmatpush2.msra.mxu0 0.0
  %680 = vmatprep.subr.mxu0 0.0
  %681 = vmatpush2.msra.mxu0 0.0
  %682 = vmatprep.subr.mxu0 0.0
  %683 = vmatpush2.msra.mxu0 0.0
  %684 = vmatprep.subr.mxu0 0.0
  %685 = vmatpush2.msra.mxu0 0.0
  %686 = vmatprep.subr.mxu0 0.0
  %687 = vmatpush2.msra.mxu0 0.0
  %688 = vmatprep.subr.mxu0 0.0
  %689 = vmatpush2.msra.mxu0 0.0
  %690 = vmatprep.subr.mxu0 0.0
  %691 = vmatpush2.msra.mxu0 0.0
  %692 = vmatprep.subr.mxu0 0.0
  %693 = vmatpush2.msra.mxu0 0.0
  %694 = vmatprep.subr.mxu0 0.0
  %695 = vmatpush2.msra.mxu0 0.0
  %696 = vmatprep.subr.mxu0 0.0
  %697 = vmatpush2.msra.mxu0 0.0
  %698 = vmatprep.subr.mxu0 0.0
  %699 = vmatpush2.msra.mxu0 0.0
  %700 = vmatprep.mubr.f32.mxu0 0.0
  %701 = vmatmul.mubr.f32.gmra.mxu0 %v551
  %v702 = vpop.f32.mrf.mxu0
  %v703 = vadd.f32 0.0, %v702
  %v704 = vpop.f32.mrf.mxu0
  %v705 = vadd.f32 0.0, %v704
  %706 = vdwg.mxu0
  %707 = vmatprep.subr.mxu0 0.0
  %708 = vmatpush1.msra.mxu0 0.0
  %709 = vmatprep.subr.mxu0 0.0
  %710 = vmatpush1.msra.mxu0 0.0
  %711 = vmatprep.subr.mxu0 0.0
  %712 = vmatpush1.msra.mxu0 0.0
  %713 = vmatprep.subr.mxu0 0.0
  %714 = vmatpush1.msra.mxu0 0.0
  %715 = vmatprep.subr.mxu0 0.0
  %716 = vmatpush1.msra.mxu0 0.0
  %717 = vmatprep.subr.mxu0 0.0
  %718 = vmatpush1.msra.mxu0 0.0
  %719 = vmatprep.subr.mxu0 0.0
  %720 = vmatpush1.msra.mxu0 0.0
  %721 = vmatprep.subr.mxu0 0.0
  %722 = vmatpush1.msra.mxu0 0.0
  %723 = vmatprep.subr.mxu0 0.0
  %724 = vmatpush1.msra.mxu0 0.0
  %725 = vmatprep.subr.mxu0 0.0
  %726 = vmatpush1.msra.mxu0 0.0
  %727 = vmatprep.subr.mxu0 0.0
  %728 = vmatpush1.msra.mxu0 0.0
  %729 = vmatprep.subr.mxu0 0.0
  %730 = vmatpush1.msra.mxu0 0.0
  %731 = vmatprep.subr.mxu0 0.0
  %732 = vmatpush1.msra.mxu0 0.0
  %733 = vmatprep.subr.mxu0 0.0
  %734 = vmatpush1.msra.mxu0 0.0
  %735 = vmatprep.subr.mxu0 0.0
  %736 = vmatpush1.msra.mxu0 0.0
  %737 = vmatprep.subr.mxu0 %v563
  %738 = vmatpush1.msra.mxu0 %v561
  %739 = vmatprep.subr.mxu0 0.0
  %740 = vmatpush2.msra.mxu0 0.0
  %741 = vmatprep.subr.mxu0 0.0
  %742 = vmatpush2.msra.mxu0 0.0
  %743 = vmatprep.subr.mxu0 0.0
  %744 = vmatpush2.msra.mxu0 0.0
  %745 = vmatprep.subr.mxu0 0.0
  %746 = vmatpush2.msra.mxu0 0.0
  %747 = vmatprep.subr.mxu0 0.0
  %748 = vmatpush2.msra.mxu0 0.0
  %749 = vmatprep.subr.mxu0 0.0
  %750 = vmatpush2.msra.mxu0 0.0
  %751 = vmatprep.subr.mxu0 0.0
  %752 = vmatpush2.msra.mxu0 0.0
  %753 = vmatprep.subr.mxu0 0.0
  %754 = vmatpush2.msra.mxu0 0.0
  %755 = vmatprep.subr.mxu0 0.0
  %756 = vmatpush2.msra.mxu0 0.0
  %757 = vmatprep.subr.mxu0 0.0
  %758 = vmatpush2.msra.mxu0 0.0
  %759 = vmatprep.subr.mxu0 0.0
  %760 = vmatpush2.msra.mxu0 0.0
  %761 = vmatprep.subr.mxu0 0.0
  %762 = vmatpush2.msra.mxu0 0.0
  %763 = vmatprep.subr.mxu0 0.0
  %764 = vmatpush2.msra.mxu0 0.0
  %765 = vmatprep.subr.mxu0 0.0
  %766 = vmatpush2.msra.mxu0 0.0
  %767 = vmatprep.subr.mxu0 0.0
  %768 = vmatpush2.msra.mxu0 0.0
  %769 = vmatprep.subr.mxu0 0.0
  %770 = vmatpush2.msra.mxu0 0.0
  %771 = vmatprep.mubr.f32.mxu0 0.0
  %772 = vmatmul.mubr.f32.gmra.mxu0 %v551
  %v773 = vpop.f32.mrf.mxu0
  %v774 = vadd.f32 0.0, %v773
  %v775 = vpop.f32.mrf.mxu0
  %v776 = vadd.f32 0.0, %v775
  %777 = vdwg.mxu0
  %v778 = vadd.f32 %v370, %v632
  %v779 = vadd.f32 %v372, %v634
  %v780 = vadd.f32 %v441, %v703
  %v781 = vadd.f32 %v443, %v705
  %v782 = vadd.f32 %v512, %v774
  %v783 = vadd.f32 %v514, %v776
  %s784 = scalar_lea.vmem %s1, 24
  %v785 = vld [vmem:[%s784] sm:$0xff]
  %v786 = vld [vmem:[%s0] sm:$0xff]
  %v787 = vld [vmem:[%s0 + $0x8] sm:$0xff]
  %v788 = vld [vmem:[%s0 + $0x10] sm:$0xff]
  %v789 = vld [vmem:[%s0 + $0x18] sm:$0xf]
  %v794 = vcombine.high %v786, %v786
  %v795 = vcombine.high %v787, %v787
  %v796 = vcombine.high %v788, %v788
  %797 = vrot.lane.b32.xlu0 %v786, 110
  %v798 = vpop.permute.xlu0 %797
  %799 = vrot.lane.b32.xlu0 %v794, 110
  %v800 = vpop.permute.xlu0 %799
  %801 = vrot.lane.b32.xlu0 %v787, 110
  %v802 = vpop.permute.xlu0 %801
  %803 = vrot.lane.b32.xlu0 %v795, 110
  %v804 = vpop.permute.xlu0 %803
  %805 = vrot.lane.b32.xlu0 %v788, 110
  %v806 = vpop.permute.xlu0 %805
  %807 = vrot.lane.b32.xlu0 %v796, 110
  %v808 = vpop.permute.xlu0 %807
  %809 = vrot.lane.b32.xlu0 %v789, 110
  %v810 = vpop.permute.xlu0 %809
  %vm811 = vcmask 900096
  %v812 = vsel %vm811, %v798, %v800
  %v813 = vsel %vm811, %v800, %v802
  %v814 = vsel %vm811, %v802, %v804
  %v815 = vsel %vm811, %v804, %v806
  %v816 = vsel %vm811, %v806, %v808
  %v817 = vsel %vm811, %v808, %v810
  %v819 = vsel %vm52, %v785, 0
  %v821 = vsel %vm56, %v812, 0
  %v823 = vsel %vm56, %v813, 0
  %v825 = vsel %vm56, %v814, 0
  %v827 = vsel %vm56, %v815, 0
  %v829 = vsel %vm56, %v816, 0
  %v831 = vsel %vm56, %v817, 0
  %833 = vmatprep.subr.mxu0 0.0
  %834 = vmatpush1.msra.mxu0 0.0
  %835 = vmatprep.subr.mxu0 0.0
  %836 = vmatpush1.msra.mxu0 0.0
  %837 = vmatprep.subr.mxu0 0.0
  %838 = vmatpush1.msra.mxu0 0.0
  %839 = vmatprep.subr.mxu0 0.0
  %840 = vmatpush1.msra.mxu0 0.0
  %841 = vmatprep.subr.mxu0 0.0
  %842 = vmatpush1.msra.mxu0 0.0
  %843 = vmatprep.subr.mxu0 0.0
  %844 = vmatpush1.msra.mxu0 0.0
  %845 = vmatprep.subr.mxu0 0.0
  %846 = vmatpush1.msra.mxu0 0.0
  %847 = vmatprep.subr.mxu0 0.0
  %848 = vmatpush1.msra.mxu0 0.0
  %849 = vmatprep.subr.mxu0 0.0
  %850 = vmatpush1.msra.mxu0 0.0
  %851 = vmatprep.subr.mxu0 0.0
  %852 = vmatpush1.msra.mxu0 0.0
  %853 = vmatprep.subr.mxu0 0.0
  %854 = vmatpush1.msra.mxu0 0.0
  %855 = vmatprep.subr.mxu0 0.0
  %856 = vmatpush1.msra.mxu0 0.0
  %857 = vmatprep.subr.mxu0 0.0
  %858 = vmatpush1.msra.mxu0 0.0
  %859 = vmatprep.subr.mxu0 0.0
  %860 = vmatpush1.msra.mxu0 0.0
  %861 = vmatprep.subr.mxu0 0.0
  %862 = vmatpush1.msra.mxu0 0.0
  %863 = vmatprep.subr.mxu0 %v823
  %864 = vmatpush1.msra.mxu0 %v821
  %865 = vmatprep.subr.mxu0 0.0
  %866 = vmatpush2.msra.mxu0 0.0
  %867 = vmatprep.subr.mxu0 0.0
  %868 = vmatpush2.msra.mxu0 0.0
  %869 = vmatprep.subr.mxu0 0.0
  %870 = vmatpush2.msra.mxu0 0.0
  %871 = vmatprep.subr.mxu0 0.0
  %872 = vmatpush2.msra.mxu0 0.0
  %873 = vmatprep.subr.mxu0 0.0
  %874 = vmatpush2.msra.mxu0 0.0
  %875 = vmatprep.subr.mxu0 0.0
  %876 = vmatpush2.msra.mxu0 0.0
  %877 = vmatprep.subr.mxu0 0.0
  %878 = vmatpush2.msra.mxu0 0.0
  %879 = vmatprep.subr.mxu0 0.0
  %880 = vmatpush2.msra.mxu0 0.0
  %881 = vmatprep.subr.mxu0 0.0
  %882 = vmatpush2.msra.mxu0 0.0
  %883 = vmatprep.subr.mxu0 0.0
  %884 = vmatpush2.msra.mxu0 0.0
  %885 = vmatprep.subr.mxu0 0.0
  %886 = vmatpush2.msra.mxu0 0.0
  %887 = vmatprep.subr.mxu0 0.0
  %888 = vmatpush2.msra.mxu0 0.0
  %889 = vmatprep.subr.mxu0 0.0
  %890 = vmatpush2.msra.mxu0 0.0
  %891 = vmatprep.subr.mxu0 0.0
  %892 = vmatpush2.msra.mxu0 0.0
  %893 = vmatprep.subr.mxu0 0.0
  %894 = vmatpush2.msra.mxu0 0.0
  %895 = vmatprep.subr.mxu0 0.0
  %896 = vmatpush2.msra.mxu0 0.0
  %897 = vmatprep.mubr.f32.mxu0 0.0
  %898 = vmatmul.mubr.f32.gmra.mxu0 %v819
  %v899 = vpop.f32.mrf.mxu0
  %v900 = vadd.f32 0.0, %v899
  %v901 = vpop.f32.mrf.mxu0
  %v902 = vadd.f32 0.0, %v901
  %903 = vdwg.mxu0
  %904 = vmatprep.subr.mxu0 0.0
  %905 = vmatpush1.msra.mxu0 0.0
  %906 = vmatprep.subr.mxu0 0.0
  %907 = vmatpush1.msra.mxu0 0.0
  %908 = vmatprep.subr.mxu0 0.0
  %909 = vmatpush1.msra.mxu0 0.0
  %910 = vmatprep.subr.mxu0 0.0
  %911 = vmatpush1.msra.mxu0 0.0
  %912 = vmatprep.subr.mxu0 0.0
  %913 = vmatpush1.msra.mxu0 0.0
  %914 = vmatprep.subr.mxu0 0.0
  %915 = vmatpush1.msra.mxu0 0.0
  %916 = vmatprep.subr.mxu0 0.0
  %917 = vmatpush1.msra.mxu0 0.0
  %918 = vmatprep.subr.mxu0 0.0
  %919 = vmatpush1.msra.mxu0 0.0
  %920 = vmatprep.subr.mxu0 0.0
  %921 = vmatpush1.msra.mxu0 0.0
  %922 = vmatprep.subr.mxu0 0.0
  %923 = vmatpush1.msra.mxu0 0.0
  %924 = vmatprep.subr.mxu0 0.0
  %925 = vmatpush1.msra.mxu0 0.0
  %926 = vmatprep.subr.mxu0 0.0
  %927 = vmatpush1.msra.mxu0 0.0
  %928 = vmatprep.subr.mxu0 0.0
  %929 = vmatpush1.msra.mxu0 0.0
  %930 = vmatprep.subr.mxu0 0.0
  %931 = vmatpush1.msra.mxu0 0.0
  %932 = vmatprep.subr.mxu0 0.0
  %933 = vmatpush1.msra.mxu0 0.0
  %934 = vmatprep.subr.mxu0 %v827
  %935 = vmatpush1.msra.mxu0 %v825
  %936 = vmatprep.subr.mxu0 0.0
  %937 = vmatpush2.msra.mxu0 0.0
  %938 = vmatprep.subr.mxu0 0.0
  %939 = vmatpush2.msra.mxu0 0.0
  %940 = vmatprep.subr.mxu0 0.0
  %941 = vmatpush2.msra.mxu0 0.0
  %942 = vmatprep.subr.mxu0 0.0
  %943 = vmatpush2.msra.mxu0 0.0
  %944 = vmatprep.subr.mxu0 0.0
  %945 = vmatpush2.msra.mxu0 0.0
  %946 = vmatprep.subr.mxu0 0.0
  %947 = vmatpush2.msra.mxu0 0.0
  %948 = vmatprep.subr.mxu0 0.0
  %949 = vmatpush2.msra.mxu0 0.0
  %950 = vmatprep.subr.mxu0 0.0
  %951 = vmatpush2.msra.mxu0 0.0
  %952 = vmatprep.subr.mxu0 0.0
  %953 = vmatpush2.msra.mxu0 0.0
  %954 = vmatprep.subr.mxu0 0.0
  %955 = vmatpush2.msra.mxu0 0.0
  %956 = vmatprep.subr.mxu0 0.0
  %957 = vmatpush2.msra.mxu0 0.0
  %958 = vmatprep.subr.mxu0 0.0
  %959 = vmatpush2.msra.mxu0 0.0
  %960 = vmatprep.subr.mxu0 0.0
  %961 = vmatpush2.msra.mxu0 0.0
  %962 = vmatprep.subr.mxu0 0.0
  %963 = vmatpush2.msra.mxu0 0.0
  %964 = vmatprep.subr.mxu0 0.0
  %965 = vmatpush2.msra.mxu0 0.0
  %966 = vmatprep.subr.mxu0 0.0
  %967 = vmatpush2.msra.mxu0 0.0
  %968 = vmatprep.mubr.f32.mxu0 0.0
  %969 = vmatmul.mubr.f32.gmra.mxu0 %v819
  %v970 = vpop.f32.mrf.mxu0
  %v971 = vadd.f32 0.0, %v970
  %v972 = vpop.f32.mrf.mxu0
  %v973 = vadd.f32 0.0, %v972
  %974 = vdwg.mxu0
  %975 = vmatprep.subr.mxu0 0.0
  %976 = vmatpush1.msra.mxu0 0.0
  %977 = vmatprep.subr.mxu0 0.0
  %978 = vmatpush1.msra.mxu0 0.0
  %979 = vmatprep.subr.mxu0 0.0
  %980 = vmatpush1.msra.mxu0 0.0
  %981 = vmatprep.subr.mxu0 0.0
  %982 = vmatpush1.msra.mxu0 0.0
  %983 = vmatprep.subr.mxu0 0.0
  %984 = vmatpush1.msra.mxu0 0.0
  %985 = vmatprep.subr.mxu0 0.0
  %986 = vmatpush1.msra.mxu0 0.0
  %987 = vmatprep.subr.mxu0 0.0
  %988 = vmatpush1.msra.mxu0 0.0
  %989 = vmatprep.subr.mxu0 0.0
  %990 = vmatpush1.msra.mxu0 0.0
  %991 = vmatprep.subr.mxu0 0.0
  %992 = vmatpush1.msra.mxu0 0.0
  %993 = vmatprep.subr.mxu0 0.0
  %994 = vmatpush1.msra.mxu0 0.0
  %995 = vmatprep.subr.mxu0 0.0
  %996 = vmatpush1.msra.mxu0 0.0
  %997 = vmatprep.subr.mxu0 0.0
  %998 = vmatpush1.msra.mxu0 0.0
  %999 = vmatprep.subr.mxu0 0.0
  %1000 = vmatpush1.msra.mxu0 0.0
  %1001 = vmatprep.subr.mxu0 0.0
  %1002 = vmatpush1.msra.mxu0 0.0
  %1003 = vmatprep.subr.mxu0 0.0
  %1004 = vmatpush1.msra.mxu0 0.0
  %1005 = vmatprep.subr.mxu0 %v831
  %1006 = vmatpush1.msra.mxu0 %v829
  %1007 = vmatprep.subr.mxu0 0.0
  %1008 = vmatpush2.msra.mxu0 0.0
  %1009 = vmatprep.subr.mxu0 0.0
  %1010 = vmatpush2.msra.mxu0 0.0
  %1011 = vmatprep.subr.mxu0 0.0
  %1012 = vmatpush2.msra.mxu0 0.0
  %1013 = vmatprep.subr.mxu0 0.0
  %1014 = vmatpush2.msra.mxu0 0.0
  %1015 = vmatprep.subr.mxu0 0.0
  %1016 = vmatpush2.msra.mxu0 0.0
  %1017 = vmatprep.subr.mxu0 0.0
  %1018 = vmatpush2.msra.mxu0 0.0
  %1019 = vmatprep.subr.mxu0 0.0
  %1020 = vmatpush2.msra.mxu0 0.0
  %1021 = vmatprep.subr.mxu0 0.0
  %1022 = vmatpush2.msra.mxu0 0.0
  %1023 = vmatprep.subr.mxu0 0.0
  %1024 = vmatpush2.msra.mxu0 0.0
  %1025 = vmatprep.subr.mxu0 0.0
  %1026 = vmatpush2.msra.mxu0 0.0
  %1027 = vmatprep.subr.mxu0 0.0
  %1028 = vmatpush2.msra.mxu0 0.0
  %1029 = vmatprep.subr.mxu0 0.0
  %1030 = vmatpush2.msra.mxu0 0.0
  %1031 = vmatprep.subr.mxu0 0.0
  %1032 = vmatpush2.msra.mxu0 0.0
  %1033 = vmatprep.subr.mxu0 0.0
  %1034 = vmatpush2.msra.mxu0 0.0
  %1035 = vmatprep.subr.mxu0 0.0
  %1036 = vmatpush2.msra.mxu0 0.0
  %1037 = vmatprep.subr.mxu0 0.0
  %1038 = vmatpush2.msra.mxu0 0.0
  %1039 = vmatprep.mubr.f32.mxu0 0.0
  %1040 = vmatmul.mubr.f32.gmra.mxu0 %v819
  %v1041 = vpop.f32.mrf.mxu0
  %v1042 = vadd.f32 0.0, %v1041
  %v1043 = vpop.f32.mrf.mxu0
  %v1044 = vadd.f32 0.0, %v1043
  %1045 = vdwg.mxu0
  %v1046 = vadd.f32 %v778, %v900
  %v1047 = vadd.f32 %v779, %v902
  %v1048 = vadd.f32 %v780, %v971
  %v1049 = vadd.f32 %v781, %v973
  %v1050 = vadd.f32 %v782, %v1042
  %v1051 = vadd.f32 %v783, %v1044
  %s1052 = scalar_lea.vmem %s1, 32
  %v1053 = vld [vmem:[%s1052] sm:$0xff]
  %v1054 = vld [vmem:[%s0] sm:$0xff]
  %v1055 = vld [vmem:[%s0 + $0x8] sm:$0xff]
  %v1056 = vld [vmem:[%s0 + $0x10] sm:$0xff]
  %v1057 = vld [vmem:[%s0 + $0x18] sm:$0xf]
  %v1062 = vcombine.high %v1054, %v1054
  %v1063 = vcombine.high %v1055, %v1055
  %v1064 = vcombine.high %v1056, %v1056
  %1065 = vrot.lane.b32.xlu0 %v1054, 109
  %v1066 = vpop.permute.xlu0 %1065
  %1067 = vrot.lane.b32.xlu0 %v1062, 109
  %v1068 = vpop.permute.xlu0 %1067
  %1069 = vrot.lane.b32.xlu0 %v1055, 109
  %v1070 = vpop.permute.xlu0 %1069
  %1071 = vrot.lane.b32.xlu0 %v1063, 109
  %v1072 = vpop.permute.xlu0 %1071
  %1073 = vrot.lane.b32.xlu0 %v1056, 109
  %v1074 = vpop.permute.xlu0 %1073
  %1075 = vrot.lane.b32.xlu0 %v1064, 109
  %v1076 = vpop.permute.xlu0 %1075
  %1077 = vrot.lane.b32.xlu0 %v1057, 109
  %v1078 = vpop.permute.xlu0 %1077
  %vm1079 = vcmask 891904
  %v1080 = vsel %vm1079, %v1066, %v1068
  %v1081 = vsel %vm1079, %v1068, %v1070
  %v1082 = vsel %vm1079, %v1070, %v1072
  %v1083 = vsel %vm1079, %v1072, %v1074
  %v1084 = vsel %vm1079, %v1074, %v1076
  %v1085 = vsel %vm1079, %v1076, %v1078
  %v1087 = vsel %vm52, %v1053, 0
  %v1089 = vsel %vm56, %v1080, 0
  %v1091 = vsel %vm56, %v1081, 0
  %v1093 = vsel %vm56, %v1082, 0
  %v1095 = vsel %vm56, %v1083, 0
  %v1097 = vsel %vm56, %v1084, 0
  %v1099 = vsel %vm56, %v1085, 0
  %1101 = vmatprep.subr.mxu0 0.0
  %1102 = vmatpush1.msra.mxu0 0.0
  %1103 = vmatprep.subr.mxu0 0.0
  %1104 = vmatpush1.msra.mxu0 0.0
  %1105 = vmatprep.subr.mxu0 0.0
  %1106 = vmatpush1.msra.mxu0 0.0
  %1107 = vmatprep.subr.mxu0 0.0
  %1108 = vmatpush1.msra.mxu0 0.0
  %1109 = vmatprep.subr.mxu0 0.0
  %1110 = vmatpush1.msra.mxu0 0.0
  %1111 = vmatprep.subr.mxu0 0.0
  %1112 = vmatpush1.msra.mxu0 0.0
  %1113 = vmatprep.subr.mxu0 0.0
  %1114 = vmatpush1.msra.mxu0 0.0
  %1115 = vmatprep.subr.mxu0 0.0
  %1116 = vmatpush1.msra.mxu0 0.0
  %1117 = vmatprep.subr.mxu0 0.0
  %1118 = vmatpush1.msra.mxu0 0.0
  %1119 = vmatprep.subr.mxu0 0.0
  %1120 = vmatpush1.msra.mxu0 0.0
  %1121 = vmatprep.subr.mxu0 0.0
  %1122 = vmatpush1.msra.mxu0 0.0
  %1123 = vmatprep.subr.mxu0 0.0
  %1124 = vmatpush1.msra.mxu0 0.0
  %1125 = vmatprep.subr.mxu0 0.0
  %1126 = vmatpush1.msra.mxu0 0.0
  %1127 = vmatprep.subr.mxu0 0.0
  %1128 = vmatpush1.msra.mxu0 0.0
  %1129 = vmatprep.subr.mxu0 0.0
  %1130 = vmatpush1.msra.mxu0 0.0
  %1131 = vmatprep.subr.mxu0 %v1091
  %1132 = vmatpush1.msra.mxu0 %v1089
  %1133 = vmatprep.subr.mxu0 0.0
  %1134 = vmatpush2.msra.mxu0 0.0
  %1135 = vmatprep.subr.mxu0 0.0
  %1136 = vmatpush2.msra.mxu0 0.0
  %1137 = vmatprep.subr.mxu0 0.0
  %1138 = vmatpush2.msra.mxu0 0.0
  %1139 = vmatprep.subr.mxu0 0.0
  %1140 = vmatpush2.msra.mxu0 0.0
  %1141 = vmatprep.subr.mxu0 0.0
  %1142 = vmatpush2.msra.mxu0 0.0
  %1143 = vmatprep.subr.mxu0 0.0
  %1144 = vmatpush2.msra.mxu0 0.0
  %1145 = vmatprep.subr.mxu0 0.0
  %1146 = vmatpush2.msra.mxu0 0.0
  %1147 = vmatprep.subr.mxu0 0.0
  %1148 = vmatpush2.msra.mxu0 0.0
  %1149 = vmatprep.subr.mxu0 0.0
  %1150 = vmatpush2.msra.mxu0 0.0
  %1151 = vmatprep.subr.mxu0 0.0
  %1152 = vmatpush2.msra.mxu0 0.0
  %1153 = vmatprep.subr.mxu0 0.0
  %1154 = vmatpush2.msra.mxu0 0.0
  %1155 = vmatprep.subr.mxu0 0.0
  %1156 = vmatpush2.msra.mxu0 0.0
  %1157 = vmatprep.subr.mxu0 0.0
  %1158 = vmatpush2.msra.mxu0 0.0
  %1159 = vmatprep.subr.mxu0 0.0
  %1160 = vmatpush2.msra.mxu0 0.0
  %1161 = vmatprep.subr.mxu0 0.0
  %1162 = vmatpush2.msra.mxu0 0.0
  %1163 = vmatprep.subr.mxu0 0.0
  %1164 = vmatpush2.msra.mxu0 0.0
  %1165 = vmatprep.mubr.f32.mxu0 0.0
  %1166 = vmatmul.mubr.f32.gmra.mxu0 %v1087
  %v1167 = vpop.f32.mrf.mxu0
  %v1168 = vadd.f32 0.0, %v1167
  %v1169 = vpop.f32.mrf.mxu0
  %v1170 = vadd.f32 0.0, %v1169
  %1171 = vdwg.mxu0
  %1172 = vmatprep.subr.mxu0 0.0
  %1173 = vmatpush1.msra.mxu0 0.0
  %1174 = vmatprep.subr.mxu0 0.0
  %1175 = vmatpush1.msra.mxu0 0.0
  %1176 = vmatprep.subr.mxu0 0.0
  %1177 = vmatpush1.msra.mxu0 0.0
  %1178 = vmatprep.subr.mxu0 0.0
  %1179 = vmatpush1.msra.mxu0 0.0
  %1180 = vmatprep.subr.mxu0 0.0
  %1181 = vmatpush1.msra.mxu0 0.0
  %1182 = vmatprep.subr.mxu0 0.0
  %1183 = vmatpush1.msra.mxu0 0.0
  %1184 = vmatprep.subr.mxu0 0.0
  %1185 = vmatpush1.msra.mxu0 0.0
  %1186 = vmatprep.subr.mxu0 0.0
  %1187 = vmatpush1.msra.mxu0 0.0
  %1188 = vmatprep.subr.mxu0 0.0
  %1189 = vmatpush1.msra.mxu0 0.0
  %1190 = vmatprep.subr.mxu0 0.0
  %1191 = vmatpush1.msra.mxu0 0.0
  %1192 = vmatprep.subr.mxu0 0.0
  %1193 = vmatpush1.msra.mxu0 0.0
  %1194 = vmatprep.subr.mxu0 0.0
  %1195 = vmatpush1.msra.mxu0 0.0
  %1196 = vmatprep.subr.mxu0 0.0
  %1197 = vmatpush1.msra.mxu0 0.0
  %1198 = vmatprep.subr.mxu0 0.0
  %1199 = vmatpush1.msra.mxu0 0.0
  %1200 = vmatprep.subr.mxu0 0.0
  %1201 = vmatpush1.msra.mxu0 0.0
  %1202 = vmatprep.subr.mxu0 %v1095
  %1203 = vmatpush1.msra.mxu0 %v1093
  %1204 = vmatprep.subr.mxu0 0.0
  %1205 = vmatpush2.msra.mxu0 0.0
  %1206 = vmatprep.subr.mxu0 0.0
  %1207 = vmatpush2.msra.mxu0 0.0
  %1208 = vmatprep.subr.mxu0 0.0
  %1209 = vmatpush2.msra.mxu0 0.0
  %1210 = vmatprep.subr.mxu0 0.0
  %1211 = vmatpush2.msra.mxu0 0.0
  %1212 = vmatprep.subr.mxu0 0.0
  %1213 = vmatpush2.msra.mxu0 0.0
  %1214 = vmatprep.subr.mxu0 0.0
  %1215 = vmatpush2.msra.mxu0 0.0
  %1216 = vmatprep.subr.mxu0 0.0
  %1217 = vmatpush2.msra.mxu0 0.0
  %1218 = vmatprep.subr.mxu0 0.0
  %1219 = vmatpush2.msra.mxu0 0.0
  %1220 = vmatprep.subr.mxu0 0.0
  %1221 = vmatpush2.msra.mxu0 0.0
  %1222 = vmatprep.subr.mxu0 0.0
  %1223 = vmatpush2.msra.mxu0 0.0
  %1224 = vmatprep.subr.mxu0 0.0
  %1225 = vmatpush2.msra.mxu0 0.0
  %1226 = vmatprep.subr.mxu0 0.0
  %1227 = vmatpush2.msra.mxu0 0.0
  %1228 = vmatprep.subr.mxu0 0.0
  %1229 = vmatpush2.msra.mxu0 0.0
  %1230 = vmatprep.subr.mxu0 0.0
  %1231 = vmatpush2.msra.mxu0 0.0
  %1232 = vmatprep.subr.mxu0 0.0
  %1233 = vmatpush2.msra.mxu0 0.0
  %1234 = vmatprep.subr.mxu0 0.0
  %1235 = vmatpush2.msra.mxu0 0.0
  %1236 = vmatprep.mubr.f32.mxu0 0.0
  %1237 = vmatmul.mubr.f32.gmra.mxu0 %v1087
  %v1238 = vpop.f32.mrf.mxu0
  %v1239 = vadd.f32 0.0, %v1238
  %v1240 = vpop.f32.mrf.mxu0
  %v1241 = vadd.f32 0.0, %v1240
  %1242 = vdwg.mxu0
  %1243 = vmatprep.subr.mxu0 0.0
  %1244 = vmatpush1.msra.mxu0 0.0
  %1245 = vmatprep.subr.mxu0 0.0
  %1246 = vmatpush1.msra.mxu0 0.0
  %1247 = vmatprep.subr.mxu0 0.0
  %1248 = vmatpush1.msra.mxu0 0.0
  %1249 = vmatprep.subr.mxu0 0.0
  %1250 = vmatpush1.msra.mxu0 0.0
  %1251 = vmatprep.subr.mxu0 0.0
  %1252 = vmatpush1.msra.mxu0 0.0
  %1253 = vmatprep.subr.mxu0 0.0
  %1254 = vmatpush1.msra.mxu0 0.0
  %1255 = vmatprep.subr.mxu0 0.0
  %1256 = vmatpush1.msra.mxu0 0.0
  %1257 = vmatprep.subr.mxu0 0.0
  %1258 = vmatpush1.msra.mxu0 0.0
  %1259 = vmatprep.subr.mxu0 0.0
  %1260 = vmatpush1.msra.mxu0 0.0
  %1261 = vmatprep.subr.mxu0 0.0
  %1262 = vmatpush1.msra.mxu0 0.0
  %1263 = vmatprep.subr.mxu0 0.0
  %1264 = vmatpush1.msra.mxu0 0.0
  %1265 = vmatprep.subr.mxu0 0.0
  %1266 = vmatpush1.msra.mxu0 0.0
  %1267 = vmatprep.subr.mxu0 0.0
  %1268 = vmatpush1.msra.mxu0 0.0
  %1269 = vmatprep.subr.mxu0 0.0
  %1270 = vmatpush1.msra.mxu0 0.0
  %1271 = vmatprep.subr.mxu0 0.0
  %1272 = vmatpush1.msra.mxu0 0.0
  %1273 = vmatprep.subr.mxu0 %v1099
  %1274 = vmatpush1.msra.mxu0 %v1097
  %1275 = vmatprep.subr.mxu0 0.0
  %1276 = vmatpush2.msra.mxu0 0.0
  %1277 = vmatprep.subr.mxu0 0.0
  %1278 = vmatpush2.msra.mxu0 0.0
  %1279 = vmatprep.subr.mxu0 0.0
  %1280 = vmatpush2.msra.mxu0 0.0
  %1281 = vmatprep.subr.mxu0 0.0
  %1282 = vmatpush2.msra.mxu0 0.0
  %1283 = vmatprep.subr.mxu0 0.0
  %1284 = vmatpush2.msra.mxu0 0.0
  %1285 = vmatprep.subr.mxu0 0.0
  %1286 = vmatpush2.msra.mxu0 0.0
  %1287 = vmatprep.subr.mxu0 0.0
  %1288 = vmatpush2.msra.mxu0 0.0
  %1289 = vmatprep.subr.mxu0 0.0
  %1290 = vmatpush2.msra.mxu0 0.0
  %1291 = vmatprep.subr.mxu0 0.0
  %1292 = vmatpush2.msra.mxu0 0.0
  %1293 = vmatprep.subr.mxu0 0.0
  %1294 = vmatpush2.msra.mxu0 0.0
  %1295 = vmatprep.subr.mxu0 0.0
  %1296 = vmatpush2.msra.mxu0 0.0
  %1297 = vmatprep.subr.mxu0 0.0
  %1298 = vmatpush2.msra.mxu0 0.0
  %1299 = vmatprep.subr.mxu0 0.0
  %1300 = vmatpush2.msra.mxu0 0.0
  %1301 = vmatprep.subr.mxu0 0.0
  %1302 = vmatpush2.msra.mxu0 0.0
  %1303 = vmatprep.subr.mxu0 0.0
  %1304 = vmatpush2.msra.mxu0 0.0
  %1305 = vmatprep.subr.mxu0 0.0
  %1306 = vmatpush2.msra.mxu0 0.0
  %1307 = vmatprep.mubr.f32.mxu0 0.0
  %1308 = vmatmul.mubr.f32.gmra.mxu0 %v1087
  %v1309 = vpop.f32.mrf.mxu0
  %v1310 = vadd.f32 0.0, %v1309
  %v1311 = vpop.f32.mrf.mxu0
  %v1312 = vadd.f32 0.0, %v1311
  %1313 = vdwg.mxu0
  %v1314 = vadd.f32 %v1046, %v1168
  %v1315 = vadd.f32 %v1047, %v1170
  %v1316 = vadd.f32 %v1048, %v1239
  %v1317 = vadd.f32 %v1049, %v1241
  %v1318 = vadd.f32 %v1050, %v1310
  %v1319 = vadd.f32 %v1051, %v1312
  %s1320 = scalar_lea.vmem %s1, 40
  %v1321 = vld [vmem:[%s1320] sm:$0xff]
  %v1322 = vld [vmem:[%s0] sm:$0xff]
  %v1323 = vld [vmem:[%s0 + $0x8] sm:$0xff]
  %v1324 = vld [vmem:[%s0 + $0x10] sm:$0xff]
  %v1325 = vld [vmem:[%s0 + $0x18] sm:$0xf]
  %v1330 = vcombine.high %v1322, %v1322
  %v1331 = vcombine.high %v1323, %v1323
  %v1332 = vcombine.high %v1324, %v1324
  %1333 = vrot.lane.b32.xlu0 %v1322, 108
  %v1334 = vpop.permute.xlu0 %1333
  %1335 = vrot.lane.b32.xlu0 %v1330, 108
  %v1336 = vpop.permute.xlu0 %1335
  %1337 = vrot.lane.b32.xlu0 %v1323, 108
  %v1338 = vpop.permute.xlu0 %1337
  %1339 = vrot.lane.b32.xlu0 %v1331, 108
  %v1340 = vpop.permute.xlu0 %1339
  %1341 = vrot.lane.b32.xlu0 %v1324, 108
  %v1342 = vpop.permute.xlu0 %1341
  %1343 = vrot.lane.b32.xlu0 %v1332, 108
  %v1344 = vpop.permute.xlu0 %1343
  %1345 = vrot.lane.b32.xlu0 %v1325, 108
  %v1346 = vpop.permute.xlu0 %1345
  %vm1347 = vcmask 883712
  %v1348 = vsel %vm1347, %v1334, %v1336
  %v1349 = vsel %vm1347, %v1336, %v1338
  %v1350 = vsel %vm1347, %v1338, %v1340
  %v1351 = vsel %vm1347, %v1340, %v1342
  %v1352 = vsel %vm1347, %v1342, %v1344
  %v1353 = vsel %vm1347, %v1344, %v1346
  %v1355 = vsel %vm52, %v1321, 0
  %v1357 = vsel %vm56, %v1348, 0
  %v1359 = vsel %vm56, %v1349, 0
  %v1361 = vsel %vm56, %v1350, 0
  %v1363 = vsel %vm56, %v1351, 0
  %v1365 = vsel %vm56, %v1352, 0
  %v1367 = vsel %vm56, %v1353, 0
  %1369 = vmatprep.subr.mxu0 0.0
  %1370 = vmatpush1.msra.mxu0 0.0
  %1371 = vmatprep.subr.mxu0 0.0
  %1372 = vmatpush1.msra.mxu0 0.0
  %1373 = vmatprep.subr.mxu0 0.0
  %1374 = vmatpush1.msra.mxu0 0.0
  %1375 = vmatprep.subr.mxu0 0.0
  %1376 = vmatpush1.msra.mxu0 0.0
  %1377 = vmatprep.subr.mxu0 0.0
  %1378 = vmatpush1.msra.mxu0 0.0
  %1379 = vmatprep.subr.mxu0 0.0
  %1380 = vmatpush1.msra.mxu0 0.0
  %1381 = vmatprep.subr.mxu0 0.0
  %1382 = vmatpush1.msra.mxu0 0.0
  %1383 = vmatprep.subr.mxu0 0.0
  %1384 = vmatpush1.msra.mxu0 0.0
  %1385 = vmatprep.subr.mxu0 0.0
  %1386 = vmatpush1.msra.mxu0 0.0
  %1387 = vmatprep.subr.mxu0 0.0
  %1388 = vmatpush1.msra.mxu0 0.0
  %1389 = vmatprep.subr.mxu0 0.0
  %1390 = vmatpush1.msra.mxu0 0.0
  %1391 = vmatprep.subr.mxu0 0.0
  %1392 = vmatpush1.msra.mxu0 0.0
  %1393 = vmatprep.subr.mxu0 0.0
  %1394 = vmatpush1.msra.mxu0 0.0
  %1395 = vmatprep.subr.mxu0 0.0
  %1396 = vmatpush1.msra.mxu0 0.0
  %1397 = vmatprep.subr.mxu0 0.0
  %1398 = vmatpush1.msra.mxu0 0.0
  %1399 = vmatprep.subr.mxu0 %v1359
  %1400 = vmatpush1.msra.mxu0 %v1357
  %1401 = vmatprep.subr.mxu0 0.0
  %1402 = vmatpush2.msra.mxu0 0.0
  %1403 = vmatprep.subr.mxu0 0.0
  %1404 = vmatpush2.msra.mxu0 0.0
  %1405 = vmatprep.subr.mxu0 0.0
  %1406 = vmatpush2.msra.mxu0 0.0
  %1407 = vmatprep.subr.mxu0 0.0
  %1408 = vmatpush2.msra.mxu0 0.0
  %1409 = vmatprep.subr.mxu0 0.0
  %1410 = vmatpush2.msra.mxu0 0.0
  %1411 = vmatprep.subr.mxu0 0.0
  %1412 = vmatpush2.msra.mxu0 0.0
  %1413 = vmatprep.subr.mxu0 0.0
  %1414 = vmatpush2.msra.mxu0 0.0
  %1415 = vmatprep.subr.mxu0 0.0
  %1416 = vmatpush2.msra.mxu0 0.0
  %1417 = vmatprep.subr.mxu0 0.0
  %1418 = vmatpush2.msra.mxu0 0.0
  %1419 = vmatprep.subr.mxu0 0.0
  %1420 = vmatpush2.msra.mxu0 0.0
  %1421 = vmatprep.subr.mxu0 0.0
  %1422 = vmatpush2.msra.mxu0 0.0
  %1423 = vmatprep.subr.mxu0 0.0
  %1424 = vmatpush2.msra.mxu0 0.0
  %1425 = vmatprep.subr.mxu0 0.0
  %1426 = vmatpush2.msra.mxu0 0.0
  %1427 = vmatprep.subr.mxu0 0.0
  %1428 = vmatpush2.msra.mxu0 0.0
  %1429 = vmatprep.subr.mxu0 0.0
  %1430 = vmatpush2.msra.mxu0 0.0
  %1431 = vmatprep.subr.mxu0 0.0
  %1432 = vmatpush2.msra.mxu0 0.0
  %1433 = vmatprep.mubr.f32.mxu0 0.0
  %1434 = vmatmul.mubr.f32.gmra.mxu0 %v1355
  %v1435 = vpop.f32.mrf.mxu0
  %v1436 = vadd.f32 0.0, %v1435
  %v1437 = vpop.f32.mrf.mxu0
  %v1438 = vadd.f32 0.0, %v1437
  %1439 = vdwg.mxu0
  %1440 = vmatprep.subr.mxu0 0.0
  %1441 = vmatpush1.msra.mxu0 0.0
  %1442 = vmatprep.subr.mxu0 0.0
  %1443 = vmatpush1.msra.mxu0 0.0
  %1444 = vmatprep.subr.mxu0 0.0
  %1445 = vmatpush1.msra.mxu0 0.0
  %1446 = vmatprep.subr.mxu0 0.0
  %1447 = vmatpush1.msra.mxu0 0.0
  %1448 = vmatprep.subr.mxu0 0.0
  %1449 = vmatpush1.msra.mxu0 0.0
  %1450 = vmatprep.subr.mxu0 0.0
  %1451 = vmatpush1.msra.mxu0 0.0
  %1452 = vmatprep.subr.mxu0 0.0
  %1453 = vmatpush1.msra.mxu0 0.0
  %1454 = vmatprep.subr.mxu0 0.0
  %1455 = vmatpush1.msra.mxu0 0.0
  %1456 = vmatprep.subr.mxu0 0.0
  %1457 = vmatpush1.msra.mxu0 0.0
  %1458 = vmatprep.subr.mxu0 0.0
  %1459 = vmatpush1.msra.mxu0 0.0
  %1460 = vmatprep.subr.mxu0 0.0
  %1461 = vmatpush1.msra.mxu0 0.0
  %1462 = vmatprep.subr.mxu0 0.0
  %1463 = vmatpush1.msra.mxu0 0.0
  %1464 = vmatprep.subr.mxu0 0.0
  %1465 = vmatpush1.msra.mxu0 0.0
  %1466 = vmatprep.subr.mxu0 0.0
  %1467 = vmatpush1.msra.mxu0 0.0
  %1468 = vmatprep.subr.mxu0 0.0
  %1469 = vmatpush1.msra.mxu0 0.0
  %1470 = vmatprep.subr.mxu0 %v1363
  %1471 = vmatpush1.msra.mxu0 %v1361
  %1472 = vmatprep.subr.mxu0 0.0
  %1473 = vmatpush2.msra.mxu0 0.0
  %1474 = vmatprep.subr.mxu0 0.0
  %1475 = vmatpush2.msra.mxu0 0.0
  %1476 = vmatprep.subr.mxu0 0.0
  %1477 = vmatpush2.msra.mxu0 0.0
  %1478 = vmatprep.subr.mxu0 0.0
  %1479 = vmatpush2.msra.mxu0 0.0
  %1480 = vmatprep.subr.mxu0 0.0
  %1481 = vmatpush2.msra.mxu0 0.0
  %1482 = vmatprep.subr.mxu0 0.0
  %1483 = vmatpush2.msra.mxu0 0.0
  %1484 = vmatprep.subr.mxu0 0.0
  %1485 = vmatpush2.msra.mxu0 0.0
  %1486 = vmatprep.subr.mxu0 0.0
  %1487 = vmatpush2.msra.mxu0 0.0
  %1488 = vmatprep.subr.mxu0 0.0
  %1489 = vmatpush2.msra.mxu0 0.0
  %1490 = vmatprep.subr.mxu0 0.0
  %1491 = vmatpush2.msra.mxu0 0.0
  %1492 = vmatprep.subr.mxu0 0.0
  %1493 = vmatpush2.msra.mxu0 0.0
  %1494 = vmatprep.subr.mxu0 0.0
  %1495 = vmatpush2.msra.mxu0 0.0
  %1496 = vmatprep.subr.mxu0 0.0
  %1497 = vmatpush2.msra.mxu0 0.0
  %1498 = vmatprep.subr.mxu0 0.0
  %1499 = vmatpush2.msra.mxu0 0.0
  %1500 = vmatprep.subr.mxu0 0.0
  %1501 = vmatpush2.msra.mxu0 0.0
  %1502 = vmatprep.subr.mxu0 0.0
  %1503 = vmatpush2.msra.mxu0 0.0
  %1504 = vmatprep.mubr.f32.mxu0 0.0
  %1505 = vmatmul.mubr.f32.gmra.mxu0 %v1355
  %v1506 = vpop.f32.mrf.mxu0
  %v1507 = vadd.f32 0.0, %v1506
  %v1508 = vpop.f32.mrf.mxu0
  %v1509 = vadd.f32 0.0, %v1508
  %1510 = vdwg.mxu0
  %1511 = vmatprep.subr.mxu0 0.0
  %1512 = vmatpush1.msra.mxu0 0.0
  %1513 = vmatprep.subr.mxu0 0.0
  %1514 = vmatpush1.msra.mxu0 0.0
  %1515 = vmatprep.subr.mxu0 0.0
  %1516 = vmatpush1.msra.mxu0 0.0
  %1517 = vmatprep.subr.mxu0 0.0
  %1518 = vmatpush1.msra.mxu0 0.0
  %1519 = vmatprep.subr.mxu0 0.0
  %1520 = vmatpush1.msra.mxu0 0.0
  %1521 = vmatprep.subr.mxu0 0.0
  %1522 = vmatpush1.msra.mxu0 0.0
  %1523 = vmatprep.subr.mxu0 0.0
  %1524 = vmatpush1.msra.mxu0 0.0
  %1525 = vmatprep.subr.mxu0 0.0
  %1526 = vmatpush1.msra.mxu0 0.0
  %1527 = vmatprep.subr.mxu0 0.0
  %1528 = vmatpush1.msra.mxu0 0.0
  %1529 = vmatprep.subr.mxu0 0.0
  %1530 = vmatpush1.msra.mxu0 0.0
  %1531 = vmatprep.subr.mxu0 0.0
  %1532 = vmatpush1.msra.mxu0 0.0
  %1533 = vmatprep.subr.mxu0 0.0
  %1534 = vmatpush1.msra.mxu0 0.0
  %1535 = vmatprep.subr.mxu0 0.0
  %1536 = vmatpush1.msra.mxu0 0.0
  %1537 = vmatprep.subr.mxu0 0.0
  %1538 = vmatpush1.msra.mxu0 0.0
  %1539 = vmatprep.subr.mxu0 0.0
  %1540 = vmatpush1.msra.mxu0 0.0
  %1541 = vmatprep.subr.mxu0 %v1367
  %1542 = vmatpush1.msra.mxu0 %v1365
  %1543 = vmatprep.subr.mxu0 0.0
  %1544 = vmatpush2.msra.mxu0 0.0
  %1545 = vmatprep.subr.mxu0 0.0
  %1546 = vmatpush2.msra.mxu0 0.0
  %1547 = vmatprep.subr.mxu0 0.0
  %1548 = vmatpush2.msra.mxu0 0.0
  %1549 = vmatprep.subr.mxu0 0.0
  %1550 = vmatpush2.msra.mxu0 0.0
  %1551 = vmatprep.subr.mxu0 0.0
  %1552 = vmatpush2.msra.mxu0 0.0
  %1553 = vmatprep.subr.mxu0 0.0
  %1554 = vmatpush2.msra.mxu0 0.0
  %1555 = vmatprep.subr.mxu0 0.0
  %1556 = vmatpush2.msra.mxu0 0.0
  %1557 = vmatprep.subr.mxu0 0.0
  %1558 = vmatpush2.msra.mxu0 0.0
  %1559 = vmatprep.subr.mxu0 0.0
  %1560 = vmatpush2.msra.mxu0 0.0
  %1561 = vmatprep.subr.mxu0 0.0
  %1562 = vmatpush2.msra.mxu0 0.0
  %1563 = vmatprep.subr.mxu0 0.0
  %1564 = vmatpush2.msra.mxu0 0.0
  %1565 = vmatprep.subr.mxu0 0.0
  %1566 = vmatpush2.msra.mxu0 0.0
  %1567 = vmatprep.subr.mxu0 0.0
  %1568 = vmatpush2.msra.mxu0 0.0
  %1569 = vmatprep.subr.mxu0 0.0
  %1570 = vmatpush2.msra.mxu0 0.0
  %1571 = vmatprep.subr.mxu0 0.0
  %1572 = vmatpush2.msra.mxu0 0.0
  %1573 = vmatprep.subr.mxu0 0.0
  %1574 = vmatpush2.msra.mxu0 0.0
  %1575 = vmatprep.mubr.f32.mxu0 0.0
  %1576 = vmatmul.mubr.f32.gmra.mxu0 %v1355
  %v1577 = vpop.f32.mrf.mxu0
  %v1578 = vadd.f32 0.0, %v1577
  %v1579 = vpop.f32.mrf.mxu0
  %v1580 = vadd.f32 0.0, %v1579
  %1581 = vdwg.mxu0
  %v1582 = vadd.f32 %v1314, %v1436
  %v1583 = vadd.f32 %v1315, %v1438
  %v1584 = vadd.f32 %v1316, %v1507
  %v1585 = vadd.f32 %v1317, %v1509
  %v1586 = vadd.f32 %v1318, %v1578
  %v1587 = vadd.f32 %v1319, %v1580
  %s1588 = scalar_lea.vmem %s1, 48
  %v1589 = vld [vmem:[%s1588] sm:$0xff]
  %v1590 = vld [vmem:[%s0] sm:$0xff]
  %v1591 = vld [vmem:[%s0 + $0x8] sm:$0xff]
  %v1592 = vld [vmem:[%s0 + $0x10] sm:$0xff]
  %v1593 = vld [vmem:[%s0 + $0x18] sm:$0xf]
  %v1598 = vcombine.high %v1590, %v1590
  %v1599 = vcombine.high %v1591, %v1591
  %v1600 = vcombine.high %v1592, %v1592
  %1601 = vrot.lane.b32.xlu0 %v1590, 92
  %v1602 = vpop.permute.xlu0 %1601
  %1603 = vrot.lane.b32.xlu0 %v1598, 92
  %v1604 = vpop.permute.xlu0 %1603
  %1605 = vrot.lane.b32.xlu0 %v1591, 92
  %v1606 = vpop.permute.xlu0 %1605
  %1607 = vrot.lane.b32.xlu0 %v1599, 92
  %v1608 = vpop.permute.xlu0 %1607
  %1609 = vrot.lane.b32.xlu0 %v1592, 92
  %v1610 = vpop.permute.xlu0 %1609
  %1611 = vrot.lane.b32.xlu0 %v1600, 92
  %v1612 = vpop.permute.xlu0 %1611
  %1613 = vrot.lane.b32.xlu0 %v1593, 92
  %v1614 = vpop.permute.xlu0 %1613
  %vm1615 = vcmask 752640
  %v1616 = vsel %vm1615, %v1602, %v1604
  %v1617 = vsel %vm1615, %v1604, %v1606
  %v1618 = vsel %vm1615, %v1606, %v1608
  %v1619 = vsel %vm1615, %v1608, %v1610
  %v1620 = vsel %vm1615, %v1610, %v1612
  %v1621 = vsel %vm1615, %v1612, %v1614
  %v1623 = vsel %vm52, %v1589, 0
  %v1625 = vsel %vm56, %v1616, 0
  %v1627 = vsel %vm56, %v1617, 0
  %v1629 = vsel %vm56, %v1618, 0
  %v1631 = vsel %vm56, %v1619, 0
  %v1633 = vsel %vm56, %v1620, 0
  %v1635 = vsel %vm56, %v1621, 0
  %1637 = vmatprep.subr.mxu0 0.0
  %1638 = vmatpush1.msra.mxu0 0.0
  %1639 = vmatprep.subr.mxu0 0.0
  %1640 = vmatpush1.msra.mxu0 0.0
  %1641 = vmatprep.subr.mxu0 0.0
  %1642 = vmatpush1.msra.mxu0 0.0
  %1643 = vmatprep.subr.mxu0 0.0
  %1644 = vmatpush1.msra.mxu0 0.0
  %1645 = vmatprep.subr.mxu0 0.0
  %1646 = vmatpush1.msra.mxu0 0.0
  %1647 = vmatprep.subr.mxu0 0.0
  %1648 = vmatpush1.msra.mxu0 0.0
  %1649 = vmatprep.subr.mxu0 0.0
  %1650 = vmatpush1.msra.mxu0 0.0
  %1651 = vmatprep.subr.mxu0 0.0
  %1652 = vmatpush1.msra.mxu0 0.0
  %1653 = vmatprep.subr.mxu0 0.0
  %1654 = vmatpush1.msra.mxu0 0.0
  %1655 = vmatprep.subr.mxu0 0.0
  %1656 = vmatpush1.msra.mxu0 0.0
  %1657 = vmatprep.subr.mxu0 0.0
  %1658 = vmatpush1.msra.mxu0 0.0
  %1659 = vmatprep.subr.mxu0 0.0
  %1660 = vmatpush1.msra.mxu0 0.0
  %1661 = vmatprep.subr.mxu0 0.0
  %1662 = vmatpush1.msra.mxu0 0.0
  %1663 = vmatprep.subr.mxu0 0.0
  %1664 = vmatpush1.msra.mxu0 0.0
  %1665 = vmatprep.subr.mxu0 0.0
  %1666 = vmatpush1.msra.mxu0 0.0
  %1667 = vmatprep.subr.mxu0 %v1627
  %1668 = vmatpush1.msra.mxu0 %v1625
  %1669 = vmatprep.subr.mxu0 0.0
  %1670 = vmatpush2.msra.mxu0 0.0
  %1671 = vmatprep.subr.mxu0 0.0
  %1672 = vmatpush2.msra.mxu0 0.0
  %1673 = vmatprep.subr.mxu0 0.0
  %1674 = vmatpush2.msra.mxu0 0.0
  %1675 = vmatprep.subr.mxu0 0.0
  %1676 = vmatpush2.msra.mxu0 0.0
  %1677 = vmatprep.subr.mxu0 0.0
  %1678 = vmatpush2.msra.mxu0 0.0
  %1679 = vmatprep.subr.mxu0 0.0
  %1680 = vmatpush2.msra.mxu0 0.0
  %1681 = vmatprep.subr.mxu0 0.0
  %1682 = vmatpush2.msra.mxu0 0.0
  %1683 = vmatprep.subr.mxu0 0.0
  %1684 = vmatpush2.msra.mxu0 0.0
  %1685 = vmatprep.subr.mxu0 0.0
  %1686 = vmatpush2.msra.mxu0 0.0
  %1687 = vmatprep.subr.mxu0 0.0
  %1688 = vmatpush2.msra.mxu0 0.0
  %1689 = vmatprep.subr.mxu0 0.0
  %1690 = vmatpush2.msra.mxu0 0.0
  %1691 = vmatprep.subr.mxu0 0.0
  %1692 = vmatpush2.msra.mxu0 0.0
  %1693 = vmatprep.subr.mxu0 0.0
  %1694 = vmatpush2.msra.mxu0 0.0
  %1695 = vmatprep.subr.mxu0 0.0
  %1696 = vmatpush2.msra.mxu0 0.0
  %1697 = vmatprep.subr.mxu0 0.0
  %1698 = vmatpush2.msra.mxu0 0.0
  %1699 = vmatprep.subr.mxu0 0.0
  %1700 = vmatpush2.msra.mxu0 0.0
  %1701 = vmatprep.mubr.f32.mxu0 0.0
  %1702 = vmatmul.mubr.f32.gmra.mxu0 %v1623
  %v1703 = vpop.f32.mrf.mxu0
  %v1704 = vadd.f32 0.0, %v1703
  %v1705 = vpop.f32.mrf.mxu0
  %v1706 = vadd.f32 0.0, %v1705
  %1707 = vdwg.mxu0
  %1708 = vmatprep.subr.mxu0 0.0
  %1709 = vmatpush1.msra.mxu0 0.0
  %1710 = vmatprep.subr.mxu0 0.0
  %1711 = vmatpush1.msra.mxu0 0.0
  %1712 = vmatprep.subr.mxu0 0.0
  %1713 = vmatpush1.msra.mxu0 0.0
  %1714 = vmatprep.subr.mxu0 0.0
  %1715 = vmatpush1.msra.mxu0 0.0
  %1716 = vmatprep.subr.mxu0 0.0
  %1717 = vmatpush1.msra.mxu0 0.0
  %1718 = vmatprep.subr.mxu0 0.0
  %1719 = vmatpush1.msra.mxu0 0.0
  %1720 = vmatprep.subr.mxu0 0.0
  %1721 = vmatpush1.msra.mxu0 0.0
  %1722 = vmatprep.subr.mxu0 0.0
  %1723 = vmatpush1.msra.mxu0 0.0
  %1724 = vmatprep.subr.mxu0 0.0
  %1725 = vmatpush1.msra.mxu0 0.0
  %1726 = vmatprep.subr.mxu0 0.0
  %1727 = vmatpush1.msra.mxu0 0.0
  %1728 = vmatprep.subr.mxu0 0.0
  %1729 = vmatpush1.msra.mxu0 0.0
  %1730 = vmatprep.subr.mxu0 0.0
  %1731 = vmatpush1.msra.mxu0 0.0
  %1732 = vmatprep.subr.mxu0 0.0
  %1733 = vmatpush1.msra.mxu0 0.0
  %1734 = vmatprep.subr.mxu0 0.0
  %1735 = vmatpush1.msra.mxu0 0.0
  %1736 = vmatprep.subr.mxu0 0.0
  %1737 = vmatpush1.msra.mxu0 0.0
  %1738 = vmatprep.subr.mxu0 %v1631
  %1739 = vmatpush1.msra.mxu0 %v1629
  %1740 = vmatprep.subr.mxu0 0.0
  %1741 = vmatpush2.msra.mxu0 0.0
  %1742 = vmatprep.subr.mxu0 0.0
  %1743 = vmatpush2.msra.mxu0 0.0
  %1744 = vmatprep.subr.mxu0 0.0
  %1745 = vmatpush2.msra.mxu0 0.0
  %1746 = vmatprep.subr.mxu0 0.0
  %1747 = vmatpush2.msra.mxu0 0.0
  %1748 = vmatprep.subr.mxu0 0.0
  %1749 = vmatpush2.msra.mxu0 0.0
  %1750 = vmatprep.subr.mxu0 0.0
  %1751 = vmatpush2.msra.mxu0 0.0
  %1752 = vmatprep.subr.mxu0 0.0
  %1753 = vmatpush2.msra.mxu0 0.0
  %1754 = vmatprep.subr.mxu0 0.0
  %1755 = vmatpush2.msra.mxu0 0.0
  %1756 = vmatprep.subr.mxu0 0.0
  %1757 = vmatpush2.msra.mxu0 0.0
  %1758 = vmatprep.subr.mxu0 0.0
  %1759 = vmatpush2.msra.mxu0 0.0
  %1760 = vmatprep.subr.mxu0 0.0
  %1761 = vmatpush2.msra.mxu0 0.0
  %1762 = vmatprep.subr.mxu0 0.0
  %1763 = vmatpush2.msra.mxu0 0.0
  %1764 = vmatprep.subr.mxu0 0.0
  %1765 = vmatpush2.msra.mxu0 0.0
  %1766 = vmatprep.subr.mxu0 0.0
  %1767 = vmatpush2.msra.mxu0 0.0
  %1768 = vmatprep.subr.mxu0 0.0
  %1769 = vmatpush2.msra.mxu0 0.0
  %1770 = vmatprep.subr.mxu0 0.0
  %1771 = vmatpush2.msra.mxu0 0.0
  %1772 = vmatprep.mubr.f32.mxu0 0.0
  %1773 = vmatmul.mubr.f32.gmra.mxu0 %v1623
  %v1774 = vpop.f32.mrf.mxu0
  %v1775 = vadd.f32 0.0, %v1774
  %v1776 = vpop.f32.mrf.mxu0
  %v1777 = vadd.f32 0.0, %v1776
  %1778 = vdwg.mxu0
  %1779 = vmatprep.subr.mxu0 0.0
  %1780 = vmatpush1.msra.mxu0 0.0
  %1781 = vmatprep.subr.mxu0 0.0
  %1782 = vmatpush1.msra.mxu0 0.0
  %1783 = vmatprep.subr.mxu0 0.0
  %1784 = vmatpush1.msra.mxu0 0.0
  %1785 = vmatprep.subr.mxu0 0.0
  %1786 = vmatpush1.msra.mxu0 0.0
  %1787 = vmatprep.subr.mxu0 0.0
  %1788 = vmatpush1.msra.mxu0 0.0
  %1789 = vmatprep.subr.mxu0 0.0
  %1790 = vmatpush1.msra.mxu0 0.0
  %1791 = vmatprep.subr.mxu0 0.0
  %1792 = vmatpush1.msra.mxu0 0.0
  %1793 = vmatprep.subr.mxu0 0.0
  %1794 = vmatpush1.msra.mxu0 0.0
  %1795 = vmatprep.subr.mxu0 0.0
  %1796 = vmatpush1.msra.mxu0 0.0
  %1797 = vmatprep.subr.mxu0 0.0
  %1798 = vmatpush1.msra.mxu0 0.0
  %1799 = vmatprep.subr.mxu0 0.0
  %1800 = vmatpush1.msra.mxu0 0.0
  %1801 = vmatprep.subr.mxu0 0.0
  %1802 = vmatpush1.msra.mxu0 0.0
  %1803 = vmatprep.subr.mxu0 0.0
  %1804 = vmatpush1.msra.mxu0 0.0
  %1805 = vmatprep.subr.mxu0 0.0
  %1806 = vmatpush1.msra.mxu0 0.0
  %1807 = vmatprep.subr.mxu0 0.0
  %1808 = vmatpush1.msra.mxu0 0.0
  %1809 = vmatprep.subr.mxu0 %v1635
  %1810 = vmatpush1.msra.mxu0 %v1633
  %1811 = vmatprep.subr.mxu0 0.0
  %1812 = vmatpush2.msra.mxu0 0.0
  %1813 = vmatprep.subr.mxu0 0.0
  %1814 = vmatpush2.msra.mxu0 0.0
  %1815 = vmatprep.subr.mxu0 0.0
  %1816 = vmatpush2.msra.mxu0 0.0
  %1817 = vmatprep.subr.mxu0 0.0
  %1818 = vmatpush2.msra.mxu0 0.0
  %1819 = vmatprep.subr.mxu0 0.0
  %1820 = vmatpush2.msra.mxu0 0.0
  %1821 = vmatprep.subr.mxu0 0.0
  %1822 = vmatpush2.msra.mxu0 0.0
  %1823 = vmatprep.subr.mxu0 0.0
  %1824 = vmatpush2.msra.mxu0 0.0
  %1825 = vmatprep.subr.mxu0 0.0
  %1826 = vmatpush2.msra.mxu0 0.0
  %1827 = vmatprep.subr.mxu0 0.0
  %1828 = vmatpush2.msra.mxu0 0.0
  %1829 = vmatprep.subr.mxu0 0.0
  %1830 = vmatpush2.msra.mxu0 0.0
  %1831 = vmatprep.subr.mxu0 0.0
  %1832 = vmatpush2.msra.mxu0 0.0
  %1833 = vmatprep.subr.mxu0 0.0
  %1834 = vmatpush2.msra.mxu0 0.0
  %1835 = vmatprep.subr.mxu0 0.0
  %1836 = vmatpush2.msra.mxu0 0.0
  %1837 = vmatprep.subr.mxu0 0.0
  %1838 = vmatpush2.msra.mxu0 0.0
  %1839 = vmatprep.subr.mxu0 0.0
  %1840 = vmatpush2.msra.mxu0 0.0
  %1841 = vmatprep.subr.mxu0 0.0
  %1842 = vmatpush2.msra.mxu0 0.0
  %1843 = vmatprep.mubr.f32.mxu0 0.0
  %1844 = vmatmul.mubr.f32.gmra.mxu0 %v1623
  %v1845 = vpop.f32.mrf.mxu0
  %v1846 = vadd.f32 0.0, %v1845
  %v1847 = vpop.f32.mrf.mxu0
  %v1848 = vadd.f32 0.0, %v1847
  %1849 = vdwg.mxu0
  %v1850 = vadd.f32 %v1582, %v1704
  %v1851 = vadd.f32 %v1583, %v1706
  %v1852 = vadd.f32 %v1584, %v1775
  %v1853 = vadd.f32 %v1585, %v1777
  %v1854 = vadd.f32 %v1586, %v1846
  %v1855 = vadd.f32 %v1587, %v1848
  %s1856 = scalar_lea.vmem %s1, 56
  %v1857 = vld [vmem:[%s1856] sm:$0xff]
  %v1858 = vld [vmem:[%s0] sm:$0xff]
  %v1859 = vld [vmem:[%s0 + $0x8] sm:$0xff]
  %v1860 = vld [vmem:[%s0 + $0x10] sm:$0xff]
  %v1861 = vld [vmem:[%s0 + $0x18] sm:$0xf]
  %v1866 = vcombine.high %v1858, %v1858
  %v1867 = vcombine.high %v1859, %v1859
  %v1868 = vcombine.high %v1860, %v1860
  %1869 = vrot.lane.b32.xlu0 %v1858, 91
  %v1870 = vpop.permute.xlu0 %1869
  %1871 = vrot.lane.b32.xlu0 %v1866, 91
  %v1872 = vpop.permute.xlu0 %1871
  %1873 = vrot.lane.b32.xlu0 %v1859, 91
  %v1874 = vpop.permute.xlu0 %1873
  %1875 = vrot.lane.b32.xlu0 %v1867, 91
  %v1876 = vpop.permute.xlu0 %1875
  %1877 = vrot.lane.b32.xlu0 %v1860, 91
  %v1878 = vpop.permute.xlu0 %1877
  %1879 = vrot.lane.b32.xlu0 %v1868, 91
  %v1880 = vpop.permute.xlu0 %1879
  %1881 = vrot.lane.b32.xlu0 %v1861, 91
  %v1882 = vpop.permute.xlu0 %1881
  %vm1883 = vcmask 744448
  %v1884 = vsel %vm1883, %v1870, %v1872
  %v1885 = vsel %vm1883, %v1872, %v1874
  %v1886 = vsel %vm1883, %v1874, %v1876
  %v1887 = vsel %vm1883, %v1876, %v1878
  %v1888 = vsel %vm1883, %v1878, %v1880
  %v1889 = vsel %vm1883, %v1880, %v1882
  %v1891 = vsel %vm52, %v1857, 0
  %v1893 = vsel %vm56, %v1884, 0
  %v1895 = vsel %vm56, %v1885, 0
  %v1897 = vsel %vm56, %v1886, 0
  %v1899 = vsel %vm56, %v1887, 0
  %v1901 = vsel %vm56, %v1888, 0
  %v1903 = vsel %vm56, %v1889, 0
  %1905 = vmatprep.subr.mxu0 0.0
  %1906 = vmatpush1.msra.mxu0 0.0
  %1907 = vmatprep.subr.mxu0 0.0
  %1908 = vmatpush1.msra.mxu0 0.0
  %1909 = vmatprep.subr.mxu0 0.0
  %1910 = vmatpush1.msra.mxu0 0.0
  %1911 = vmatprep.subr.mxu0 0.0
  %1912 = vmatpush1.msra.mxu0 0.0
  %1913 = vmatprep.subr.mxu0 0.0
  %1914 = vmatpush1.msra.mxu0 0.0
  %1915 = vmatprep.subr.mxu0 0.0
  %1916 = vmatpush1.msra.mxu0 0.0
  %1917 = vmatprep.subr.mxu0 0.0
  %1918 = vmatpush1.msra.mxu0 0.0
  %1919 = vmatprep.subr.mxu0 0.0
  %1920 = vmatpush1.msra.mxu0 0.0
  %1921 = vmatprep.subr.mxu0 0.0
  %1922 = vmatpush1.msra.mxu0 0.0
  %1923 = vmatprep.subr.mxu0 0.0
  %1924 = vmatpush1.msra.mxu0 0.0
  %1925 = vmatprep.subr.mxu0 0.0
  %1926 = vmatpush1.msra.mxu0 0.0
  %1927 = vmatprep.subr.mxu0 0.0
  %1928 = vmatpush1.msra.mxu0 0.0
  %1929 = vmatprep.subr.mxu0 0.0
  %1930 = vmatpush1.msra.mxu0 0.0
  %1931 = vmatprep.subr.mxu0 0.0
  %1932 = vmatpush1.msra.mxu0 0.0
  %1933 = vmatprep.subr.mxu0 0.0
  %1934 = vmatpush1.msra.mxu0 0.0
  %1935 = vmatprep.subr.mxu0 %v1895
  %1936 = vmatpush1.msra.mxu0 %v1893
  %1937 = vmatprep.subr.mxu0 0.0
  %1938 = vmatpush2.msra.mxu0 0.0
  %1939 = vmatprep.subr.mxu0 0.0
  %1940 = vmatpush2.msra.mxu0 0.0
  %1941 = vmatprep.subr.mxu0 0.0
  %1942 = vmatpush2.msra.mxu0 0.0
  %1943 = vmatprep.subr.mxu0 0.0
  %1944 = vmatpush2.msra.mxu0 0.0
  %1945 = vmatprep.subr.mxu0 0.0
  %1946 = vmatpush2.msra.mxu0 0.0
  %1947 = vmatprep.subr.mxu0 0.0
  %1948 = vmatpush2.msra.mxu0 0.0
  %1949 = vmatprep.subr.mxu0 0.0
  %1950 = vmatpush2.msra.mxu0 0.0
  %1951 = vmatprep.subr.mxu0 0.0
  %1952 = vmatpush2.msra.mxu0 0.0
  %1953 = vmatprep.subr.mxu0 0.0
  %1954 = vmatpush2.msra.mxu0 0.0
  %1955 = vmatprep.subr.mxu0 0.0
  %1956 = vmatpush2.msra.mxu0 0.0
  %1957 = vmatprep.subr.mxu0 0.0
  %1958 = vmatpush2.msra.mxu0 0.0
  %1959 = vmatprep.subr.mxu0 0.0
  %1960 = vmatpush2.msra.mxu0 0.0
  %1961 = vmatprep.subr.mxu0 0.0
  %1962 = vmatpush2.msra.mxu0 0.0
  %1963 = vmatprep.subr.mxu0 0.0
  %1964 = vmatpush2.msra.mxu0 0.0
  %1965 = vmatprep.subr.mxu0 0.0
  %1966 = vmatpush2.msra.mxu0 0.0
  %1967 = vmatprep.subr.mxu0 0.0
  %1968 = vmatpush2.msra.mxu0 0.0
  %1969 = vmatprep.mubr.f32.mxu0 0.0
  %1970 = vmatmul.mubr.f32.gmra.mxu0 %v1891
  %v1971 = vpop.f32.mrf.mxu0
  %v1972 = vadd.f32 0.0, %v1971
  %v1973 = vpop.f32.mrf.mxu0
  %v1974 = vadd.f32 0.0, %v1973
  %1975 = vdwg.mxu0
  %1976 = vmatprep.subr.mxu0 0.0
  %1977 = vmatpush1.msra.mxu0 0.0
  %1978 = vmatprep.subr.mxu0 0.0
  %1979 = vmatpush1.msra.mxu0 0.0
  %1980 = vmatprep.subr.mxu0 0.0
  %1981 = vmatpush1.msra.mxu0 0.0
  %1982 = vmatprep.subr.mxu0 0.0
  %1983 = vmatpush1.msra.mxu0 0.0
  %1984 = vmatprep.subr.mxu0 0.0
  %1985 = vmatpush1.msra.mxu0 0.0
  %1986 = vmatprep.subr.mxu0 0.0
  %1987 = vmatpush1.msra.mxu0 0.0
  %1988 = vmatprep.subr.mxu0 0.0
  %1989 = vmatpush1.msra.mxu0 0.0
  %1990 = vmatprep.subr.mxu0 0.0
  %1991 = vmatpush1.msra.mxu0 0.0
  %1992 = vmatprep.subr.mxu0 0.0
  %1993 = vmatpush1.msra.mxu0 0.0
  %1994 = vmatprep.subr.mxu0 0.0
  %1995 = vmatpush1.msra.mxu0 0.0
  %1996 = vmatprep.subr.mxu0 0.0
  %1997 = vmatpush1.msra.mxu0 0.0
  %1998 = vmatprep.subr.mxu0 0.0
  %1999 = vmatpush1.msra.mxu0 0.0
  %2000 = vmatprep.subr.mxu0 0.0
  %2001 = vmatpush1.msra.mxu0 0.0
  %2002 = vmatprep.subr.mxu0 0.0
  %2003 = vmatpush1.msra.mxu0 0.0
  %2004 = vmatprep.subr.mxu0 0.0
  %2005 = vmatpush1.msra.mxu0 0.0
  %2006 = vmatprep.subr.mxu0 %v1899
  %2007 = vmatpush1.msra.mxu0 %v1897
  %2008 = vmatprep.subr.mxu0 0.0
  %2009 = vmatpush2.msra.mxu0 0.0
  %2010 = vmatprep.subr.mxu0 0.0
  %2011 = vmatpush2.msra.mxu0 0.0
  %2012 = vmatprep.subr.mxu0 0.0
  %2013 = vmatpush2.msra.mxu0 0.0
  %2014 = vmatprep.subr.mxu0 0.0
  %2015 = vmatpush2.msra.mxu0 0.0
  %2016 = vmatprep.subr.mxu0 0.0
  %2017 = vmatpush2.msra.mxu0 0.0
  %2018 = vmatprep.subr.mxu0 0.0
  %2019 = vmatpush2.msra.mxu0 0.0
  %2020 = vmatprep.subr.mxu0 0.0
  %2021 = vmatpush2.msra.mxu0 0.0
  %2022 = vmatprep.subr.mxu0 0.0
  %2023 = vmatpush2.msra.mxu0 0.0
  %2024 = vmatprep.subr.mxu0 0.0
  %2025 = vmatpush2.msra.mxu0 0.0
  %2026 = vmatprep.subr.mxu0 0.0
  %2027 = vmatpush2.msra.mxu0 0.0
  %2028 = vmatprep.subr.mxu0 0.0
  %2029 = vmatpush2.msra.mxu0 0.0
  %2030 = vmatprep.subr.mxu0 0.0
  %2031 = vmatpush2.msra.mxu0 0.0
  %2032 = vmatprep.subr.mxu0 0.0
  %2033 = vmatpush2.msra.mxu0 0.0
  %2034 = vmatprep.subr.mxu0 0.0
  %2035 = vmatpush2.msra.mxu0 0.0
  %2036 = vmatprep.subr.mxu0 0.0
  %2037 = vmatpush2.msra.mxu0 0.0
  %2038 = vmatprep.subr.mxu0 0.0
  %2039 = vmatpush2.msra.mxu0 0.0
  %2040 = vmatprep.mubr.f32.mxu0 0.0
  %2041 = vmatmul.mubr.f32.gmra.mxu0 %v1891
  %v2042 = vpop.f32.mrf.mxu0
  %v2043 = vadd.f32 0.0, %v2042
  %v2044 = vpop.f32.mrf.mxu0
  %v2045 = vadd.f32 0.0, %v2044
  %2046 = vdwg.mxu0
  %2047 = vmatprep.subr.mxu0 0.0
  %2048 = vmatpush1.msra.mxu0 0.0
  %2049 = vmatprep.subr.mxu0 0.0
  %2050 = vmatpush1.msra.mxu0 0.0
  %2051 = vmatprep.subr.mxu0 0.0
  %2052 = vmatpush1.msra.mxu0 0.0
  %2053 = vmatprep.subr.mxu0 0.0
  %2054 = vmatpush1.msra.mxu0 0.0
  %2055 = vmatprep.subr.mxu0 0.0
  %2056 = vmatpush1.msra.mxu0 0.0
  %2057 = vmatprep.subr.mxu0 0.0
  %2058 = vmatpush1.msra.mxu0 0.0
  %2059 = vmatprep.subr.mxu0 0.0
  %2060 = vmatpush1.msra.mxu0 0.0
  %2061 = vmatprep.subr.mxu0 0.0
  %2062 = vmatpush1.msra.mxu0 0.0
  %2063 = vmatprep.subr.mxu0 0.0
  %2064 = vmatpush1.msra.mxu0 0.0
  %2065 = vmatprep.subr.mxu0 0.0
  %2066 = vmatpush1.msra.mxu0 0.0
  %2067 = vmatprep.subr.mxu0 0.0
  %2068 = vmatpush1.msra.mxu0 0.0
  %2069 = vmatprep.subr.mxu0 0.0
  %2070 = vmatpush1.msra.mxu0 0.0
  %2071 = vmatprep.subr.mxu0 0.0
  %2072 = vmatpush1.msra.mxu0 0.0
  %2073 = vmatprep.subr.mxu0 0.0
  %2074 = vmatpush1.msra.mxu0 0.0
  %2075 = vmatprep.subr.mxu0 0.0
  %2076 = vmatpush1.msra.mxu0 0.0
  %2077 = vmatprep.subr.mxu0 %v1903
  %2078 = vmatpush1.msra.mxu0 %v1901
  %2079 = vmatprep.subr.mxu0 0.0
  %2080 = vmatpush2.msra.mxu0 0.0
  %2081 = vmatprep.subr.mxu0 0.0
  %2082 = vmatpush2.msra.mxu0 0.0
  %2083 = vmatprep.subr.mxu0 0.0
  %2084 = vmatpush2.msra.mxu0 0.0
  %2085 = vmatprep.subr.mxu0 0.0
  %2086 = vmatpush2.msra.mxu0 0.0
  %2087 = vmatprep.subr.mxu0 0.0
  %2088 = vmatpush2.msra.mxu0 0.0
  %2089 = vmatprep.subr.mxu0 0.0
  %2090 = vmatpush2.msra.mxu0 0.0
  %2091 = vmatprep.subr.mxu0 0.0
  %2092 = vmatpush2.msra.mxu0 0.0
  %2093 = vmatprep.subr.mxu0 0.0
  %2094 = vmatpush2.msra.mxu0 0.0
  %2095 = vmatprep.subr.mxu0 0.0
  %2096 = vmatpush2.msra.mxu0 0.0
  %2097 = vmatprep.subr.mxu0 0.0
  %2098 = vmatpush2.msra.mxu0 0.0
  %2099 = vmatprep.subr.mxu0 0.0
  %2100 = vmatpush2.msra.mxu0 0.0
  %2101 = vmatprep.subr.mxu0 0.0
  %2102 = vmatpush2.msra.mxu0 0.0
  %2103 = vmatprep.subr.mxu0 0.0
  %2104 = vmatpush2.msra.mxu0 0.0
  %2105 = vmatprep.subr.mxu0 0.0
  %2106 = vmatpush2.msra.mxu0 0.0
  %2107 = vmatprep.subr.mxu0 0.0
  %2108 = vmatpush2.msra.mxu0 0.0
  %2109 = vmatprep.subr.mxu0 0.0
  %2110 = vmatpush2.msra.mxu0 0.0
  %2111 = vmatprep.mubr.f32.mxu0 0.0
  %2112 = vmatmul.mubr.f32.gmra.mxu0 %v1891
  %v2113 = vpop.f32.mrf.mxu0
  %v2114 = vadd.f32 0.0, %v2113
  %v2115 = vpop.f32.mrf.mxu0
  %v2116 = vadd.f32 0.0, %v2115
  %2117 = vdwg.mxu0
  %v2118 = vadd.f32 %v1850, %v1972
  %v2119 = vadd.f32 %v1851, %v1974
  %v2120 = vadd.f32 %v1852, %v2043
  %v2121 = vadd.f32 %v1853, %v2045
  %v2122 = vadd.f32 %v1854, %v2114
  %v2123 = vadd.f32 %v1855, %v2116
  %s2124 = scalar_lea.vmem %s1, 64
  %v2125 = vld [vmem:[%s2124] sm:$0xff]
  %v2126 = vld [vmem:[%s0] sm:$0xff]
  %v2127 = vld [vmem:[%s0 + $0x8] sm:$0xff]
  %v2128 = vld [vmem:[%s0 + $0x10] sm:$0xff]
  %v2129 = vld [vmem:[%s0 + $0x18] sm:$0xf]
  %v2134 = vcombine.high %v2126, %v2126
  %v2135 = vcombine.high %v2127, %v2127
  %v2136 = vcombine.high %v2128, %v2128
  %2137 = vrot.lane.b32.xlu0 %v2126, 90
  %v2138 = vpop.permute.xlu0 %2137
  %2139 = vrot.lane.b32.xlu0 %v2134, 90
  %v2140 = vpop.permute.xlu0 %2139
  %2141 = vrot.lane.b32.xlu0 %v2127, 90
  %v2142 = vpop.permute.xlu0 %2141
  %2143 = vrot.lane.b32.xlu0 %v2135, 90
  %v2144 = vpop.permute.xlu0 %2143
  %2145 = vrot.lane.b32.xlu0 %v2128, 90
  %v2146 = vpop.permute.xlu0 %2145
  %2147 = vrot.lane.b32.xlu0 %v2136, 90
  %v2148 = vpop.permute.xlu0 %2147
  %2149 = vrot.lane.b32.xlu0 %v2129, 90
  %v2150 = vpop.permute.xlu0 %2149
  %vm2151 = vcmask 736256
  %v2152 = vsel %vm2151, %v2138, %v2140
  %v2153 = vsel %vm2151, %v2140, %v2142
  %v2154 = vsel %vm2151, %v2142, %v2144
  %v2155 = vsel %vm2151, %v2144, %v2146
  %v2156 = vsel %vm2151, %v2146, %v2148
  %v2157 = vsel %vm2151, %v2148, %v2150
  %v2159 = vsel %vm52, %v2125, 0
  %v2161 = vsel %vm56, %v2152, 0
  %v2163 = vsel %vm56, %v2153, 0
  %v2165 = vsel %vm56, %v2154, 0
  %v2167 = vsel %vm56, %v2155, 0
  %v2169 = vsel %vm56, %v2156, 0
  %v2171 = vsel %vm56, %v2157, 0
  %2173 = vmatprep.subr.mxu0 0.0
  %2174 = vmatpush1.msra.mxu0 0.0
  %2175 = vmatprep.subr.mxu0 0.0
  %2176 = vmatpush1.msra.mxu0 0.0
  %2177 = vmatprep.subr.mxu0 0.0
  %2178 = vmatpush1.msra.mxu0 0.0
  %2179 = vmatprep.subr.mxu0 0.0
  %2180 = vmatpush1.msra.mxu0 0.0
  %2181 = vmatprep.subr.mxu0 0.0
  %2182 = vmatpush1.msra.mxu0 0.0
  %2183 = vmatprep.subr.mxu0 0.0
  %2184 = vmatpush1.msra.mxu0 0.0
  %2185 = vmatprep.subr.mxu0 0.0
  %2186 = vmatpush1.msra.mxu0 0.0
  %2187 = vmatprep.subr.mxu0 0.0
  %2188 = vmatpush1.msra.mxu0 0.0
  %2189 = vmatprep.subr.mxu0 0.0
  %2190 = vmatpush1.msra.mxu0 0.0
  %2191 = vmatprep.subr.mxu0 0.0
  %2192 = vmatpush1.msra.mxu0 0.0
  %2193 = vmatprep.subr.mxu0 0.0
  %2194 = vmatpush1.msra.mxu0 0.0
  %2195 = vmatprep.subr.mxu0 0.0
  %2196 = vmatpush1.msra.mxu0 0.0
  %2197 = vmatprep.subr.mxu0 0.0
  %2198 = vmatpush1.msra.mxu0 0.0
  %2199 = vmatprep.subr.mxu0 0.0
  %2200 = vmatpush1.msra.mxu0 0.0
  %2201 = vmatprep.subr.mxu0 0.0
  %2202 = vmatpush1.msra.mxu0 0.0
  %2203 = vmatprep.subr.mxu0 %v2163
  %2204 = vmatpush1.msra.mxu0 %v2161
  %2205 = vmatprep.subr.mxu0 0.0
  %2206 = vmatpush2.msra.mxu0 0.0
  %2207 = vmatprep.subr.mxu0 0.0
  %2208 = vmatpush2.msra.mxu0 0.0
  %2209 = vmatprep.subr.mxu0 0.0
  %2210 = vmatpush2.msra.mxu0 0.0
  %2211 = vmatprep.subr.mxu0 0.0
  %2212 = vmatpush2.msra.mxu0 0.0
  %2213 = vmatprep.subr.mxu0 0.0
  %2214 = vmatpush2.msra.mxu0 0.0
  %2215 = vmatprep.subr.mxu0 0.0
  %2216 = vmatpush2.msra.mxu0 0.0
  %2217 = vmatprep.subr.mxu0 0.0
  %2218 = vmatpush2.msra.mxu0 0.0
  %2219 = vmatprep.subr.mxu0 0.0
  %2220 = vmatpush2.msra.mxu0 0.0
  %2221 = vmatprep.subr.mxu0 0.0
  %2222 = vmatpush2.msra.mxu0 0.0
  %2223 = vmatprep.subr.mxu0 0.0
  %2224 = vmatpush2.msra.mxu0 0.0
  %2225 = vmatprep.subr.mxu0 0.0
  %2226 = vmatpush2.msra.mxu0 0.0
  %2227 = vmatprep.subr.mxu0 0.0
  %2228 = vmatpush2.msra.mxu0 0.0
  %2229 = vmatprep.subr.mxu0 0.0
  %2230 = vmatpush2.msra.mxu0 0.0
  %2231 = vmatprep.subr.mxu0 0.0
  %2232 = vmatpush2.msra.mxu0 0.0
  %2233 = vmatprep.subr.mxu0 0.0
  %2234 = vmatpush2.msra.mxu0 0.0
  %2235 = vmatprep.subr.mxu0 0.0
  %2236 = vmatpush2.msra.mxu0 0.0
  %2237 = vmatprep.mubr.f32.mxu0 0.0
  %2238 = vmatmul.mubr.f32.gmra.mxu0 %v2159
  %v2239 = vpop.f32.mrf.mxu0
  %v2240 = vadd.f32 0.0, %v2239
  %v2241 = vpop.f32.mrf.mxu0
  %v2242 = vadd.f32 0.0, %v2241
  %2243 = vdwg.mxu0
  %2244 = vmatprep.subr.mxu0 0.0
  %2245 = vmatpush1.msra.mxu0 0.0
  %2246 = vmatprep.subr.mxu0 0.0
  %2247 = vmatpush1.msra.mxu0 0.0
  %2248 = vmatprep.subr.mxu0 0.0
  %2249 = vmatpush1.msra.mxu0 0.0
  %2250 = vmatprep.subr.mxu0 0.0
  %2251 = vmatpush1.msra.mxu0 0.0
  %2252 = vmatprep.subr.mxu0 0.0
  %2253 = vmatpush1.msra.mxu0 0.0
  %2254 = vmatprep.subr.mxu0 0.0
  %2255 = vmatpush1.msra.mxu0 0.0
  %2256 = vmatprep.subr.mxu0 0.0
  %2257 = vmatpush1.msra.mxu0 0.0
  %2258 = vmatprep.subr.mxu0 0.0
  %2259 = vmatpush1.msra.mxu0 0.0
  %2260 = vmatprep.subr.mxu0 0.0
  %2261 = vmatpush1.msra.mxu0 0.0
  %2262 = vmatprep.subr.mxu0 0.0
  %2263 = vmatpush1.msra.mxu0 0.0
  %2264 = vmatprep.subr.mxu0 0.0
  %2265 = vmatpush1.msra.mxu0 0.0
  %2266 = vmatprep.subr.mxu0 0.0
  %2267 = vmatpush1.msra.mxu0 0.0
  %2268 = vmatprep.subr.mxu0 0.0
  %2269 = vmatpush1.msra.mxu0 0.0
  %2270 = vmatprep.subr.mxu0 0.0
  %2271 = vmatpush1.msra.mxu0 0.0
  %2272 = vmatprep.subr.mxu0 0.0
  %2273 = vmatpush1.msra.mxu0 0.0
  %2274 = vmatprep.subr.mxu0 %v2167
  %2275 = vmatpush1.msra.mxu0 %v2165
  %2276 = vmatprep.subr.mxu0 0.0
  %2277 = vmatpush2.msra.mxu0 0.0
  %2278 = vmatprep.subr.mxu0 0.0
  %2279 = vmatpush2.msra.mxu0 0.0
  %2280 = vmatprep.subr.mxu0 0.0
  %2281 = vmatpush2.msra.mxu0 0.0
  %2282 = vmatprep.subr.mxu0 0.0
  %2283 = vmatpush2.msra.mxu0 0.0
  %2284 = vmatprep.subr.mxu0 0.0
  %2285 = vmatpush2.msra.mxu0 0.0
  %2286 = vmatprep.subr.mxu0 0.0
  %2287 = vmatpush2.msra.mxu0 0.0
  %2288 = vmatprep.subr.mxu0 0.0
  %2289 = vmatpush2.msra.mxu0 0.0
  %2290 = vmatprep.subr.mxu0 0.0
  %2291 = vmatpush2.msra.mxu0 0.0
  %2292 = vmatprep.subr.mxu0 0.0
  %2293 = vmatpush2.msra.mxu0 0.0
  %2294 = vmatprep.subr.mxu0 0.0
  %2295 = vmatpush2.msra.mxu0 0.0
  %2296 = vmatprep.subr.mxu0 0.0
  %2297 = vmatpush2.msra.mxu0 0.0
  %2298 = vmatprep.subr.mxu0 0.0
  %2299 = vmatpush2.msra.mxu0 0.0
  %2300 = vmatprep.subr.mxu0 0.0
  %2301 = vmatpush2.msra.mxu0 0.0
  %2302 = vmatprep.subr.mxu0 0.0
  %2303 = vmatpush2.msra.mxu0 0.0
  %2304 = vmatprep.subr.mxu0 0.0
  %2305 = vmatpush2.msra.mxu0 0.0
  %2306 = vmatprep.subr.mxu0 0.0
  %2307 = vmatpush2.msra.mxu0 0.0
  %2308 = vmatprep.mubr.f32.mxu0 0.0
  %2309 = vmatmul.mubr.f32.gmra.mxu0 %v2159
  %v2310 = vpop.f32.mrf.mxu0
  %v2311 = vadd.f32 0.0, %v2310
  %v2312 = vpop.f32.mrf.mxu0
  %v2313 = vadd.f32 0.0, %v2312
  %2314 = vdwg.mxu0
  %2315 = vmatprep.subr.mxu0 0.0
  %2316 = vmatpush1.msra.mxu0 0.0
  %2317 = vmatprep.subr.mxu0 0.0
  %2318 = vmatpush1.msra.mxu0 0.0
  %2319 = vmatprep.subr.mxu0 0.0
  %2320 = vmatpush1.msra.mxu0 0.0
  %2321 = vmatprep.subr.mxu0 0.0
  %2322 = vmatpush1.msra.mxu0 0.0
  %2323 = vmatprep.subr.mxu0 0.0
  %2324 = vmatpush1.msra.mxu0 0.0
  %2325 = vmatprep.subr.mxu0 0.0
  %2326 = vmatpush1.msra.mxu0 0.0
  %2327 = vmatprep.subr.mxu0 0.0
  %2328 = vmatpush1.msra.mxu0 0.0
  %2329 = vmatprep.subr.mxu0 0.0
  %2330 = vmatpush1.msra.mxu0 0.0
  %2331 = vmatprep.subr.mxu0 0.0
  %2332 = vmatpush1.msra.mxu0 0.0
  %2333 = vmatprep.subr.mxu0 0.0
  %2334 = vmatpush1.msra.mxu0 0.0
  %2335 = vmatprep.subr.mxu0 0.0
  %2336 = vmatpush1.msra.mxu0 0.0
  %2337 = vmatprep.subr.mxu0 0.0
  %2338 = vmatpush1.msra.mxu0 0.0
  %2339 = vmatprep.subr.mxu0 0.0
  %2340 = vmatpush1.msra.mxu0 0.0
  %2341 = vmatprep.subr.mxu0 0.0
  %2342 = vmatpush1.msra.mxu0 0.0
  %2343 = vmatprep.subr.mxu0 0.0
  %2344 = vmatpush1.msra.mxu0 0.0
  %2345 = vmatprep.subr.mxu0 %v2171
  %2346 = vmatpush1.msra.mxu0 %v2169
  %2347 = vmatprep.subr.mxu0 0.0
  %2348 = vmatpush2.msra.mxu0 0.0
  %2349 = vmatprep.subr.mxu0 0.0
  %2350 = vmatpush2.msra.mxu0 0.0
  %2351 = vmatprep.subr.mxu0 0.0
  %2352 = vmatpush2.msra.mxu0 0.0
  %2353 = vmatprep.subr.mxu0 0.0
  %2354 = vmatpush2.msra.mxu0 0.0
  %2355 = vmatprep.subr.mxu0 0.0
  %2356 = vmatpush2.msra.mxu0 0.0
  %2357 = vmatprep.subr.mxu0 0.0
  %2358 = vmatpush2.msra.mxu0 0.0
  %2359 = vmatprep.subr.mxu0 0.0
  %2360 = vmatpush2.msra.mxu0 0.0
  %2361 = vmatprep.subr.mxu0 0.0
  %2362 = vmatpush2.msra.mxu0 0.0
  %2363 = vmatprep.subr.mxu0 0.0
  %2364 = vmatpush2.msra.mxu0 0.0
  %2365 = vmatprep.subr.mxu0 0.0
  %2366 = vmatpush2.msra.mxu0 0.0
  %2367 = vmatprep.subr.mxu0 0.0
  %2368 = vmatpush2.msra.mxu0 0.0
  %2369 = vmatprep.subr.mxu0 0.0
  %2370 = vmatpush2.msra.mxu0 0.0
  %2371 = vmatprep.subr.mxu0 0.0
  %2372 = vmatpush2.msra.mxu0 0.0
  %2373 = vmatprep.subr.mxu0 0.0
  %2374 = vmatpush2.msra.mxu0 0.0
  %2375 = vmatprep.subr.mxu0 0.0
  %2376 = vmatpush2.msra.mxu0 0.0
  %2377 = vmatprep.subr.mxu0 0.0
  %2378 = vmatpush2.msra.mxu0 0.0
  %2379 = vmatprep.mubr.f32.mxu0 0.0
  %2380 = vmatmul.mubr.f32.gmra.mxu0 %v2159
  %v2381 = vpop.f32.mrf.mxu0
  %v2382 = vadd.f32 0.0, %v2381
  %v2383 = vpop.f32.mrf.mxu0
  %v2384 = vadd.f32 0.0, %v2383
  %2385 = vdwg.mxu0
  %v2386 = vadd.f32 %v2118, %v2240
  %v2387 = vadd.f32 %v2119, %v2242
  %v2388 = vadd.f32 %v2120, %v2311
  %v2389 = vadd.f32 %v2121, %v2313
  %v2390 = vadd.f32 %v2122, %v2382
  %v2391 = vadd.f32 %v2123, %v2384
  %v2392 = vld [vmem:[%s2] sm:$0xff]
  %v2393 = vld [vmem:[%s2 + $0x8] sm:$0xff]
  %v2394 = vld [vmem:[%s2 + $0x10] sm:$0xff]
  %v2395 = vadd.f32 %v2386, %v2392
  %v2396 = vadd.f32 %v2387, %v2393
  %v2397 = vadd.f32 %v2388, %v2394
  %2398 = vst [vmem:[%s3] sm:$0xff] %v2395
  %2399 = vst [vmem:[%s3 + $0x8] sm:$0xff] %v2396
  %2400 = vst [vmem:[%s3 + $0x10] sm:$0xff] %v2397
  %v2401 = vadd.f32 %v2389, %v2392
  %v2402 = vadd.f32 %v2390, %v2393
  %v2403 = vadd.f32 %v2391, %v2394
  %s2404 = scalar_lea.vmem %s3, 24
  %2405 = vst [vmem:[%s2404] sm:$0xff] %v2401
  %2406 = vst [vmem:[%s2404 + $0x8] sm:$0xff] %v2402
  %2407 = vst [vmem:[%s2404 + $0x10] sm:$0xff] %v2403
  // Predicated region
  $region14: #{coord_conv.1} parent=0 // pred_check
    _
  $region15: #{coord_conv.1} parent=0 // pred_check_branch
    %2409 = sbr.rel (0) target = $region17
  $region16: #{coord_conv.1} parent=0 // pred_region
    _
  $region17: #{coord_conv.1} parent=0 // pred_fallthru
    _
  // Predicated region
  $region18: #{coord_conv.1} parent=0 // pred_check
    _
  $region19: #{coord_conv.1} parent=0 // pred_check_branch
    %2411 = sbr.rel (0) target = $region21
  $region20: #{coord_conv.1} parent=0 // pred_region
    _
  $region21: #{coord_conv.1} parent=0 // pred_fallthru
    _

</llo_original>
